<compile_context>
chip_gen: v5e
topology: v5e:2x2
jax: 0.10.0
libtpu: 0.0.40
codegen_flags: <defaults>
</compile_context>

<pallas_src>
import functools

import jax
import jax.numpy as jnp
from jax import lax
from jax.experimental import pallas as pl
from jax.experimental.pallas import tpu as pltpu


# ----------------------------------------------------------------------------
# Kernel: one grid step == one sentence.
#   sent_ref : (S, T) int32   SMEM (scalar prefetch)
#   emb_ref  : (V, E) f32     VMEM (resident across grid)
#   wih_ref  : (E, 4H) bf16   VMEM (resident)
#   whh_ref  : (H, 4H) bf16   VMEM (resident)
#   b_ref    : (1, 4H) f32    VMEM (resident)
#   wlin_ref : (H, O)  bf16   VMEM (resident)
#   blin_ref : (1, O)  f32    VMEM (resident)
#   out_ref  : (T, O)  f32    (leading sentence dim squeezed)
# ----------------------------------------------------------------------------
def lstm_head_kernel(sent_ref, emb_ref, wih_ref, whh_ref, b_ref, wlin_ref,
                     blin_ref, out_ref, x_sc, hseq_sc, xproj_sc):
    s = pl.program_id(0)
    T = x_sc.shape[0]
    H = whh_ref.shape[0]

    # --- fused embedding gather: ids live in SMEM, table in VMEM ------------
    for t in range(T):                       # static T, unrolled at trace time
        row = sent_ref[s, t]
        x_sc[pl.ds(t, 1), :] = emb_ref[pl.ds(row, 1), :]

    # --- hoisted input projection: all T steps in one MXU pass --------------
    # bf16 operands, f32 accumulation. NOTE: bit-parity with PyTorch f32 would
    # need f32 operands + precision=HIGHEST; not required here.
    xproj_sc[...] = (
        jnp.dot(x_sc[...].astype(jnp.bfloat16), wih_ref[...],
                preferred_element_type=jnp.float32)
        + b_ref[...])                                   # (T, 4H)

    whh = whh_ref[...]                                  # hoist bf16 weight load

    def step(t, carry):
        h, c = carry                                    # (1, H) f32, in vregs
        gates = xproj_sc[pl.ds(t, 1), :] + jnp.dot(
            h.astype(jnp.bfloat16), whh,
            preferred_element_type=jnp.float32)         # (1, 4H), order i,f,g,o
        sig = jax.nn.sigmoid(gates)                     # one full-width EUP pass
        g_g = jnp.tanh(gates[:, 2 * H:3 * H])           # tanh only on the g gate
        i_g = sig[:, 0 * H:1 * H]
        f_g = sig[:, 1 * H:2 * H]
        o_g = sig[:, 3 * H:4 * H]
        c_new = f_g * c + i_g * g_g
        h_new = o_g * jnp.tanh(c_new)
        hseq_sc[pl.ds(t, 1), :] = h_new                 # stays in VMEM
        return h_new, c_new

    h0 = jnp.zeros((1, H), jnp.float32)                 # zero initial state
    c0 = jnp.zeros((1, H), jnp.float32)
    lax.fori_loop(0, T, step, (h0, c0), unroll=True)    # short fixed serial loop

    # --- classifier head + log_softmax over the class axis ------------------
    logits = (jnp.dot(hseq_sc[...].astype(jnp.bfloat16), wlin_ref[...],
                      preferred_element_type=jnp.float32) + blin_ref[...])
    m = jnp.max(logits, axis=-1, keepdims=True)
    shifted = logits - m
    lse = jnp.log(jnp.sum(jnp.exp(shifted), axis=-1, keepdims=True))
    out_ref[...] = shifted - lse                        # single (T, O) store


@functools.partial(jax.jit, static_argnames=("hidden_dim",))
def lstm_forward(sentences, params, hidden_dim):
    """sentences: (S, T) or (T,) int32 -> log-probs (S, T, O) or (T, O)."""
    squeeze = sentences.ndim == 1
    if squeeze:
        sentences = sentences[None, :]
    S, T = sentences.shape
    V, E = params["embedding"].shape
    H = hidden_dim
    O = params["w_lin_t"].shape[-1]

    out = pl.pallas_call(
        lstm_head_kernel,
        out_shape=jax.ShapeDtypeStruct((S, T, O), jnp.float32),
        grid_spec=pltpu.PrefetchScalarGridSpec(
            num_scalar_prefetch=1,                       # sentences -> SMEM
            grid=(S,),
            in_specs=[
                # constant index_maps => weights stay VMEM-resident across grid
                pl.BlockSpec((V, E), lambda s, sent: (0, 0)),
                pl.BlockSpec((E, 4 * H), lambda s, sent: (0, 0)),
                pl.BlockSpec((H, 4 * H), lambda s, sent: (0, 0)),
                pl.BlockSpec((1, 4 * H), lambda s, sent: (0, 0)),
                pl.BlockSpec((H, O), lambda s, sent: (0, 0)),
                pl.BlockSpec((1, O), lambda s, sent: (0, 0)),
            ],
            out_specs=pl.BlockSpec((None, T, O), lambda s, sent: (s, 0, 0)),
            scratch_shapes=[
                pltpu.VMEM((T, E), jnp.float32),         # gathered embeddings
                pltpu.VMEM((T, H), jnp.float32),         # per-step hidden states
                pltpu.VMEM((T, 4 * H), jnp.float32),     # precomputed input proj
            ]),
        compiler_params=pltpu.CompilerParams(
            dimension_semantics=("parallel",)),          # 2 TCs on v7x
    )(sentences, params["embedding"], params["w_ih_t"], params["w_hh_t"],
      params["b_lstm"], params["w_lin_t"], params["b_lin"])
    return out[0] if squeeze else out


def init_params(key, embedding_dim, vocab_size, hidden_dim, output_dim):
    keys = jax.random.split(key, 7)
    scale = 0.1
    emb = scale * jax.random.normal(keys[0], (vocab_size, embedding_dim),
                                    jnp.float32)
    # PyTorch nn.LSTM params: weight_ih (4H, E), weight_hh (4H, H),
    # bias_ih (4H,), bias_hh (4H,); nn.Linear: weight (O, H), bias (O,).
    w_ih = scale * jax.random.normal(keys[1], (4 * hidden_dim, embedding_dim),
                                     jnp.float32)
    w_hh = scale * jax.random.normal(keys[2], (4 * hidden_dim, hidden_dim),
                                     jnp.float32)
    b_ih = scale * jax.random.normal(keys[3], (4 * hidden_dim,), jnp.float32)
    b_hh = scale * jax.random.normal(keys[4], (4 * hidden_dim,), jnp.float32)
    w_lin = scale * jax.random.normal(keys[5], (output_dim, hidden_dim),
                                      jnp.float32)
    b_lin = scale * jax.random.normal(keys[6], (output_dim,), jnp.float32)
    return {
        "embedding": emb,                                   # (V, E)  f32
        "w_ih_t": w_ih.T.astype(jnp.bfloat16),              # (E, 4H) bf16
        "w_hh_t": w_hh.T.astype(jnp.bfloat16),              # (H, 4H) bf16
        "b_lstm": (b_ih + b_hh).reshape(1, -1),             # (1, 4H) f32
        "w_lin_t": w_lin.T.astype(jnp.bfloat16),            # (H, O)  bf16
        "b_lin": b_lin.reshape(1, -1),                      # (1, O)  f32
    }


def lstm_forward_ref(sentences, params, hidden_dim):
    """Pure-JAX reference (same bf16 weights, f32 math) for correctness."""
    emb = params["embedding"]
    wih = params["w_ih_t"].astype(jnp.float32)
    whh = params["w_hh_t"].astype(jnp.float32)
    b = params["b_lstm"][0]
    wlin = params["w_lin_t"].astype(jnp.float32)
    blin = params["b_lin"][0]
    H = hidden_dim

    def one_sentence(ids):
        x = emb[ids]                                     # (T, E)
        xp = x @ wih + b                                 # (T, 4H)

        def step(carry, g_in):
            h, c = carry
            gates = g_in + h @ whh
            i = jax.nn.sigmoid(gates[0 * H:1 * H])
            f = jax.nn.sigmoid(gates[1 * H:2 * H])
            g = jnp.tanh(gates[2 * H:3 * H])
            o = jax.nn.sigmoid(gates[3 * H:4 * H])
            c = f * c + i * g
            h = o * jnp.tanh(c)
            return (h, c), h

        _, hs = lax.scan(step, (jnp.zeros(H), jnp.zeros(H)), xp)
        logits = hs @ wlin + blin
        return jax.nn.log_softmax(logits, axis=-1)

    return jax.vmap(one_sentence)(sentences)


if __name__ == "__main__":
    embedding_dim = 32
    vocab_size = 16
    hidden_dim = 32
    output_dim = 8
    seq_len = 8
    num_sentences = 4

    key = jax.random.PRNGKey(0)
    pkey, skey = jax.random.split(key)
    params = init_params(pkey, embedding_dim, vocab_size, hidden_dim,
                         output_dim)
    sentences = jax.random.randint(skey, (num_sentences, seq_len), 0,
                                   vocab_size, dtype=jnp.int32)

    log_prob = lstm_forward(sentences, params, hidden_dim)
    jax.block_until_ready(log_prob)

    assert log_prob.shape == (num_sentences, seq_len, output_dim)
    # rows of log_softmax must sum (in prob space) to 1
    assert bool(jnp.allclose(jnp.sum(jnp.exp(log_prob), axis=-1), 1.0,
                             atol=1e-4))
    # compare against pure-JAX reference (generous tol for bf16 MXU path)
    ref = lstm_forward_ref(sentences, params, hidden_dim)
    assert bool(jnp.allclose(log_prob, ref, atol=3e-2)), (
        float(jnp.max(jnp.abs(log_prob - ref))))
    print("KERNEL_OK")
</pallas_src>

<mosaic_0001>
module attributes {stable_mosaic.version = 11 : i64} {
  func.func @lstm_head_kernel(%arg0: i32, %arg1: memref<4x8xi32, #tpu.memory_space<smem>>, %arg2: memref<16x32xf32, #tpu.memory_space<vmem>>, %arg3: memref<32x128xbf16, #tpu.memory_space<vmem>>, %arg4: memref<32x128xbf16, #tpu.memory_space<vmem>>, %arg5: memref<1x128xf32, #tpu.memory_space<vmem>>, %arg6: memref<32x8xbf16, #tpu.memory_space<vmem>>, %arg7: memref<1x8xf32, #tpu.memory_space<vmem>>, %arg8: memref<1x8x8xf32, #tpu.memory_space<vmem>>, %arg9: memref<8x32xf32, #tpu.memory_space<vmem>>, %arg10: memref<8x32xf32, #tpu.memory_space<vmem>>, %arg11: memref<8x128xf32, #tpu.memory_space<vmem>>) attributes {dimension_semantics = [#tpu.dimension_semantics<parallel>], iteration_bounds = array<i64: 4>, scalar_prefetch = 1 : i64, scratch_operands = 3 : i64, tpu.core_type = #tpu.core_type<tc>, window_params = [{pipeline_mode = #tpu.pipeline_mode<synchronous>, transform_indices = @transform_0, window_bounds = array<i64: 16, 32>}, {pipeline_mode = #tpu.pipeline_mode<synchronous>, transform_indices = @transform_1, window_bounds = array<i64: 32, 128>}, {pipeline_mode = #tpu.pipeline_mode<synchronous>, transform_indices = @transform_2, window_bounds = array<i64: 32, 128>}, {pipeline_mode = #tpu.pipeline_mode<synchronous>, transform_indices = @transform_3, window_bounds = array<i64: 1, 128>}, {pipeline_mode = #tpu.pipeline_mode<synchronous>, transform_indices = @transform_4, window_bounds = array<i64: 32, 8>}, {pipeline_mode = #tpu.pipeline_mode<synchronous>, transform_indices = @transform_5, window_bounds = array<i64: 1, 8>}, {transform_indices = @transform_6, window_bounds = array<i64: 1, 8, 8>}]} {
    %0 = arith.index_cast %arg0 : i32 to index
    %c0 = arith.constant 0 : index
    %1 = memref.load %arg1[%0, %c0] : memref<4x8xi32, #tpu.memory_space<smem>>
    %2 = arith.index_cast %1 : i32 to index
    %c0_0 = arith.constant 0 : index
    %3 = vector.load %arg2[%2, %c0_0] : memref<16x32xf32, #tpu.memory_space<vmem>>, vector<1x32xf32>
    %c0_1 = arith.constant 0 : index
    %c0_2 = arith.constant 0 : index
    %4 = vector.load %arg9[%c0_1, %c0_2] : memref<8x32xf32, #tpu.memory_space<vmem>>, vector<1x32xf32>
    tpu.vector_store %arg9[%c0_1, %c0_2], %3 {strides = array<i32>} : memref<8x32xf32, #tpu.memory_space<vmem>>, vector<1x32xf32>,
    %5 = arith.index_cast %arg0 : i32 to index
    %c1 = arith.constant 1 : index
    %6 = memref.load %arg1[%5, %c1] : memref<4x8xi32, #tpu.memory_space<smem>>
    %7 = arith.index_cast %6 : i32 to index
    %c0_3 = arith.constant 0 : index
    %8 = vector.load %arg2[%7, %c0_3] : memref<16x32xf32, #tpu.memory_space<vmem>>, vector<1x32xf32>
    %c1_4 = arith.constant 1 : index
    %c0_5 = arith.constant 0 : index
    %9 = vector.load %arg9[%c1_4, %c0_5] : memref<8x32xf32, #tpu.memory_space<vmem>>, vector<1x32xf32>
    tpu.vector_store %arg9[%c1_4, %c0_5], %8 {strides = array<i32>} : memref<8x32xf32, #tpu.memory_space<vmem>>, vector<1x32xf32>,
    %10 = arith.index_cast %arg0 : i32 to index
    %c2 = arith.constant 2 : index
    %11 = memref.load %arg1[%10, %c2] : memref<4x8xi32, #tpu.memory_space<smem>>
    %12 = arith.index_cast %11 : i32 to index
    %c0_6 = arith.constant 0 : index
    %13 = vector.load %arg2[%12, %c0_6] : memref<16x32xf32, #tpu.memory_space<vmem>>, vector<1x32xf32>
    %c2_7 = arith.constant 2 : index
    %c0_8 = arith.constant 0 : index
    %14 = vector.load %arg9[%c2_7, %c0_8] : memref<8x32xf32, #tpu.memory_space<vmem>>, vector<1x32xf32>
    tpu.vector_store %arg9[%c2_7, %c0_8], %13 {strides = array<i32>} : memref<8x32xf32, #tpu.memory_space<vmem>>, vector<1x32xf32>,
    %15 = arith.index_cast %arg0 : i32 to index
    %c3 = arith.constant 3 : index
    %16 = memref.load %arg1[%15, %c3] : memref<4x8xi32, #tpu.memory_space<smem>>
    %17 = arith.index_cast %16 : i32 to index
    %c0_9 = arith.constant 0 : index
    %18 = vector.load %arg2[%17, %c0_9] : memref<16x32xf32, #tpu.memory_space<vmem>>, vector<1x32xf32>
    %c3_10 = arith.constant 3 : index
    %c0_11 = arith.constant 0 : index
    %19 = vector.load %arg9[%c3_10, %c0_11] : memref<8x32xf32, #tpu.memory_space<vmem>>, vector<1x32xf32>
    tpu.vector_store %arg9[%c3_10, %c0_11], %18 {strides = array<i32>} : memref<8x32xf32, #tpu.memory_space<vmem>>, vector<1x32xf32>,
    %20 = arith.index_cast %arg0 : i32 to index
    %c4 = arith.constant 4 : index
    %21 = memref.load %arg1[%20, %c4] : memref<4x8xi32, #tpu.memory_space<smem>>
    %22 = arith.index_cast %21 : i32 to index
    %c0_12 = arith.constant 0 : index
    %23 = vector.load %arg2[%22, %c0_12] : memref<16x32xf32, #tpu.memory_space<vmem>>, vector<1x32xf32>
    %c4_13 = arith.constant 4 : index
    %c0_14 = arith.constant 0 : index
    %24 = vector.load %arg9[%c4_13, %c0_14] : memref<8x32xf32, #tpu.memory_space<vmem>>, vector<1x32xf32>
    tpu.vector_store %arg9[%c4_13, %c0_14], %23 {strides = array<i32>} : memref<8x32xf32, #tpu.memory_space<vmem>>, vector<1x32xf32>,
    %25 = arith.index_cast %arg0 : i32 to index
    %c5 = arith.constant 5 : index
    %26 = memref.load %arg1[%25, %c5] : memref<4x8xi32, #tpu.memory_space<smem>>
    %27 = arith.index_cast %26 : i32 to index
    %c0_15 = arith.constant 0 : index
    %28 = vector.load %arg2[%27, %c0_15] : memref<16x32xf32, #tpu.memory_space<vmem>>, vector<1x32xf32>
    %c5_16 = arith.constant 5 : index
    %c0_17 = arith.constant 0 : index
    %29 = vector.load %arg9[%c5_16, %c0_17] : memref<8x32xf32, #tpu.memory_space<vmem>>, vector<1x32xf32>
    tpu.vector_store %arg9[%c5_16, %c0_17], %28 {strides = array<i32>} : memref<8x32xf32, #tpu.memory_space<vmem>>, vector<1x32xf32>,
    %30 = arith.index_cast %arg0 : i32 to index
    %c6 = arith.constant 6 : index
    %31 = memref.load %arg1[%30, %c6] : memref<4x8xi32, #tpu.memory_space<smem>>
    %32 = arith.index_cast %31 : i32 to index
    %c0_18 = arith.constant 0 : index
    %33 = vector.load %arg2[%32, %c0_18] : memref<16x32xf32, #tpu.memory_space<vmem>>, vector<1x32xf32>
    %c6_19 = arith.constant 6 : index
    %c0_20 = arith.constant 0 : index
    %34 = vector.load %arg9[%c6_19, %c0_20] : memref<8x32xf32, #tpu.memory_space<vmem>>, vector<1x32xf32>
    tpu.vector_store %arg9[%c6_19, %c0_20], %33 {strides = array<i32>} : memref<8x32xf32, #tpu.memory_space<vmem>>, vector<1x32xf32>,
    %35 = arith.index_cast %arg0 : i32 to index
    %c7 = arith.constant 7 : index
    %36 = memref.load %arg1[%35, %c7] : memref<4x8xi32, #tpu.memory_space<smem>>
    %37 = arith.index_cast %36 : i32 to index
    %c0_21 = arith.constant 0 : index
    %38 = vector.load %arg2[%37, %c0_21] : memref<16x32xf32, #tpu.memory_space<vmem>>, vector<1x32xf32>
    %c7_22 = arith.constant 7 : index
    %c0_23 = arith.constant 0 : index
    %39 = vector.load %arg9[%c7_22, %c0_23] : memref<8x32xf32, #tpu.memory_space<vmem>>, vector<1x32xf32>
    tpu.vector_store %arg9[%c7_22, %c0_23], %38 {strides = array<i32>} : memref<8x32xf32, #tpu.memory_space<vmem>>, vector<1x32xf32>,
    %c0_24 = arith.constant 0 : index
    %c0_25 = arith.constant 0 : index
    %40 = vector.load %arg9[%c0_24, %c0_25] : memref<8x32xf32, #tpu.memory_space<vmem>>, vector<8x32xf32>
    %41 = arith.truncf %40 : vector<8x32xf32> to vector<8x32xbf16>
    %c0_26 = arith.constant 0 : index
    %c0_27 = arith.constant 0 : index
    %42 = vector.load %arg3[%c0_26, %c0_27] : memref<32x128xbf16, #tpu.memory_space<vmem>>, vector<32x128xbf16>
    %cst = arith.constant dense<0.000000e+00> : vector<8x128xf32>
    %43 = tpu.matmul %41, %42, %cst {dimension_numbers = #tpu.dot_dimension_numbers<[1], [0], [0], [1], [0, 0, 1, 1], [], []>} : vector<8x32xbf16>, vector<32x128xbf16>, vector<8x128xf32> -> vector<8x128xf32>
    %c0_28 = arith.constant 0 : index
    %c0_29 = arith.constant 0 : index
    %44 = vector.load %arg5[%c0_28, %c0_29] : memref<1x128xf32, #tpu.memory_space<vmem>>, vector<1x128xf32>
    %45 = vector.broadcast %44 : vector<1x128xf32> to vector<8x128xf32>
    %46 = arith.addf %43, %45 : vector<8x128xf32>
    %c0_30 = arith.constant 0 : index
    %c0_31 = arith.constant 0 : index
    %47 = vector.load %arg11[%c0_30, %c0_31] : memref<8x128xf32, #tpu.memory_space<vmem>>, vector<8x128xf32>
    tpu.vector_store %arg11[%c0_30, %c0_31], %46 {strides = array<i32>} : memref<8x128xf32, #tpu.memory_space<vmem>>, vector<8x128xf32>,
    %c0_32 = arith.constant 0 : index
    %c0_33 = arith.constant 0 : index
    %48 = vector.load %arg4[%c0_32, %c0_33] : memref<32x128xbf16, #tpu.memory_space<vmem>>, vector<32x128xbf16>
    %cst_34 = arith.constant 0.000000e+00 : f32
    %49 = vector.broadcast %cst_34 : f32 to vector<1x32xf32>
    %cst_35 = arith.constant 0.000000e+00 : f32
    %50 = vector.broadcast %cst_35 : f32 to vector<1x32xf32>
    %c0_i32 = arith.constant 0 : i32
    %51 = arith.index_cast %c0_i32 : i32 to index
    %c0_36 = arith.constant 0 : index
    %52 = vector.load %arg11[%51, %c0_36] : memref<8x128xf32, #tpu.memory_space<vmem>>, vector<1x128xf32>
    %53 = arith.truncf %49 : vector<1x32xf32> to vector<1x32xbf16>
    %cst_37 = arith.constant dense<0.000000e+00> : vector<1x128xf32>
    %54 = tpu.matmul %53, %48, %cst_37 {dimension_numbers = #tpu.dot_dimension_numbers<[1], [0], [0], [1], [0, 0, 1, 1], [], []>} : vector<1x32xbf16>, vector<32x128xbf16>, vector<1x128xf32> -> vector<1x128xf32>
    %55 = arith.addf %52, %54 : vector<1x128xf32>
    %56 = arith.negf %55 : vector<1x128xf32>
    %57 = math.exp %56 : vector<1x128xf32>
    %cst_38 = arith.constant 1.000000e+00 : f32
    %58 = vector.broadcast %cst_38 : f32 to vector<1x128xf32>
    %59 = arith.addf %58, %57 : vector<1x128xf32>
    %60 = arith.divf %58, %59 : vector<1x128xf32>
    %61 = vector.extract_strided_slice %55 {offsets = [0, 64], sizes = [1, 32], strides = [1, 1]} : vector<1x128xf32> to vector<1x32xf32>
    %62 = math.tanh %61 : vector<1x32xf32>
    %63 = vector.extract_strided_slice %60 {offsets = [0, 0], sizes = [1, 32], strides = [1, 1]} : vector<1x128xf32> to vector<1x32xf32>
    %64 = vector.extract_strided_slice %60 {offsets = [0, 32], sizes = [1, 32], strides = [1, 1]} : vector<1x128xf32> to vector<1x32xf32>
    %65 = vector.extract_strided_slice %60 {offsets = [0, 96], sizes = [1, 32], strides = [1, 1]} : vector<1x128xf32> to vector<1x32xf32>
    %66 = arith.mulf %64, %50 : vector<1x32xf32>
    %67 = arith.mulf %63, %62 : vector<1x32xf32>
    %68 = arith.addf %66, %67 : vector<1x32xf32>
    %69 = math.tanh %68 : vector<1x32xf32>
    %70 = arith.mulf %65, %69 : vector<1x32xf32>
    %71 = arith.index_cast %c0_i32 : i32 to index
    %c0_39 = arith.constant 0 : index
    %72 = vector.load %arg10[%71, %c0_39] : memref<8x32xf32, #tpu.memory_space<vmem>>, vector<1x32xf32>
    tpu.vector_store %arg10[%71, %c0_39], %70 {strides = array<i32>} : memref<8x32xf32, #tpu.memory_space<vmem>>, vector<1x32xf32>,
    %c1_i32 = arith.constant 1 : i32
    %73 = arith.index_cast %c1_i32 : i32 to index
    %c0_40 = arith.constant 0 : index
    %74 = vector.load %arg11[%73, %c0_40] : memref<8x128xf32, #tpu.memory_space<vmem>>, vector<1x128xf32>
    %75 = arith.truncf %70 : vector<1x32xf32> to vector<1x32xbf16>
    %cst_41 = arith.constant dense<0.000000e+00> : vector<1x128xf32>
    %76 = tpu.matmul %75, %48, %cst_41 {dimension_numbers = #tpu.dot_dimension_numbers<[1], [0], [0], [1], [0, 0, 1, 1], [], []>} : vector<1x32xbf16>, vector<32x128xbf16>, vector<1x128xf32> -> vector<1x128xf32>
    %77 = arith.addf %74, %76 : vector<1x128xf32>
    %78 = arith.negf %77 : vector<1x128xf32>
    %79 = math.exp %78 : vector<1x128xf32>
    %cst_42 = arith.constant 1.000000e+00 : f32
    %80 = vector.broadcast %cst_42 : f32 to vector<1x128xf32>
    %81 = arith.addf %80, %79 : vector<1x128xf32>
    %82 = arith.divf %80, %81 : vector<1x128xf32>
    %83 = vector.extract_strided_slice %77 {offsets = [0, 64], sizes = [1, 32], strides = [1, 1]} : vector<1x128xf32> to vector<1x32xf32>
    %84 = math.tanh %83 : vector<1x32xf32>
    %85 = vector.extract_strided_slice %82 {offsets = [0, 0], sizes = [1, 32], strides = [1, 1]} : vector<1x128xf32> to vector<1x32xf32>
    %86 = vector.extract_strided_slice %82 {offsets = [0, 32], sizes = [1, 32], strides = [1, 1]} : vector<1x128xf32> to vector<1x32xf32>
    %87 = vector.extract_strided_slice %82 {offsets = [0, 96], sizes = [1, 32], strides = [1, 1]} : vector<1x128xf32> to vector<1x32xf32>
    %88 = arith.mulf %86, %68 : vector<1x32xf32>
    %89 = arith.mulf %85, %84 : vector<1x32xf32>
    %90 = arith.addf %88, %89 : vector<1x32xf32>
    %91 = math.tanh %90 : vector<1x32xf32>
    %92 = arith.mulf %87, %91 : vector<1x32xf32>
    %93 = arith.index_cast %c1_i32 : i32 to index
    %c0_43 = arith.constant 0 : index
    %94 = vector.load %arg10[%93, %c0_43] : memref<8x32xf32, #tpu.memory_space<vmem>>, vector<1x32xf32>
    tpu.vector_store %arg10[%93, %c0_43], %92 {strides = array<i32>} : memref<8x32xf32, #tpu.memory_space<vmem>>, vector<1x32xf32>,
    %c2_i32 = arith.constant 2 : i32
    %95 = arith.index_cast %c2_i32 : i32 to index
    %c0_44 = arith.constant 0 : index
    %96 = vector.load %arg11[%95, %c0_44] : memref<8x128xf32, #tpu.memory_space<vmem>>, vector<1x128xf32>
    %97 = arith.truncf %92 : vector<1x32xf32> to vector<1x32xbf16>
    %cst_45 = arith.constant dense<0.000000e+00> : vector<1x128xf32>
    %98 = tpu.matmul %97, %48, %cst_45 {dimension_numbers = #tpu.dot_dimension_numbers<[1], [0], [0], [1], [0, 0, 1, 1], [], []>} : vector<1x32xbf16>, vector<32x128xbf16>, vector<1x128xf32> -> vector<1x128xf32>
    %99 = arith.addf %96, %98 : vector<1x128xf32>
    %100 = arith.negf %99 : vector<1x128xf32>
    %101 = math.exp %100 : vector<1x128xf32>
    %cst_46 = arith.constant 1.000000e+00 : f32
    %102 = vector.broadcast %cst_46 : f32 to vector<1x128xf32>
    %103 = arith.addf %102, %101 : vector<1x128xf32>
    %104 = arith.divf %102, %103 : vector<1x128xf32>
    %105 = vector.extract_strided_slice %99 {offsets = [0, 64], sizes = [1, 32], strides = [1, 1]} : vector<1x128xf32> to vector<1x32xf32>
    %106 = math.tanh %105 : vector<1x32xf32>
    %107 = vector.extract_strided_slice %104 {offsets = [0, 0], sizes = [1, 32], strides = [1, 1]} : vector<1x128xf32> to vector<1x32xf32>
    %108 = vector.extract_strided_slice %104 {offsets = [0, 32], sizes = [1, 32], strides = [1, 1]} : vector<1x128xf32> to vector<1x32xf32>
    %109 = vector.extract_strided_slice %104 {offsets = [0, 96], sizes = [1, 32], strides = [1, 1]} : vector<1x128xf32> to vector<1x32xf32>
    %110 = arith.mulf %108, %90 : vector<1x32xf32>
    %111 = arith.mulf %107, %106 : vector<1x32xf32>
    %112 = arith.addf %110, %111 : vector<1x32xf32>
    %113 = math.tanh %112 : vector<1x32xf32>
    %114 = arith.mulf %109, %113 : vector<1x32xf32>
    %115 = arith.index_cast %c2_i32 : i32 to index
    %c0_47 = arith.constant 0 : index
    %116 = vector.load %arg10[%115, %c0_47] : memref<8x32xf32, #tpu.memory_space<vmem>>, vector<1x32xf32>
    tpu.vector_store %arg10[%115, %c0_47], %114 {strides = array<i32>} : memref<8x32xf32, #tpu.memory_space<vmem>>, vector<1x32xf32>,
    %c3_i32 = arith.constant 3 : i32
    %117 = arith.index_cast %c3_i32 : i32 to index
    %c0_48 = arith.constant 0 : index
    %118 = vector.load %arg11[%117, %c0_48] : memref<8x128xf32, #tpu.memory_space<vmem>>, vector<1x128xf32>
    %119 = arith.truncf %114 : vector<1x32xf32> to vector<1x32xbf16>
    %cst_49 = arith.constant dense<0.000000e+00> : vector<1x128xf32>
    %120 = tpu.matmul %119, %48, %cst_49 {dimension_numbers = #tpu.dot_dimension_numbers<[1], [0], [0], [1], [0, 0, 1, 1], [], []>} : vector<1x32xbf16>, vector<32x128xbf16>, vector<1x128xf32> -> vector<1x128xf32>
    %121 = arith.addf %118, %120 : vector<1x128xf32>
    %122 = arith.negf %121 : vector<1x128xf32>
    %123 = math.exp %122 : vector<1x128xf32>
    %cst_50 = arith.constant 1.000000e+00 : f32
    %124 = vector.broadcast %cst_50 : f32 to vector<1x128xf32>
    %125 = arith.addf %124, %123 : vector<1x128xf32>
    %126 = arith.divf %124, %125 : vector<1x128xf32>
    %127 = vector.extract_strided_slice %121 {offsets = [0, 64], sizes = [1, 32], strides = [1, 1]} : vector<1x128xf32> to vector<1x32xf32>
    %128 = math.tanh %127 : vector<1x32xf32>
    %129 = vector.extract_strided_slice %126 {offsets = [0, 0], sizes = [1, 32], strides = [1, 1]} : vector<1x128xf32> to vector<1x32xf32>
    %130 = vector.extract_strided_slice %126 {offsets = [0, 32], sizes = [1, 32], strides = [1, 1]} : vector<1x128xf32> to vector<1x32xf32>
    %131 = vector.extract_strided_slice %126 {offsets = [0, 96], sizes = [1, 32], strides = [1, 1]} : vector<1x128xf32> to vector<1x32xf32>
    %132 = arith.mulf %130, %112 : vector<1x32xf32>
    %133 = arith.mulf %129, %128 : vector<1x32xf32>
    %134 = arith.addf %132, %133 : vector<1x32xf32>
    %135 = math.tanh %134 : vector<1x32xf32>
    %136 = arith.mulf %131, %135 : vector<1x32xf32>
    %137 = arith.index_cast %c3_i32 : i32 to index
    %c0_51 = arith.constant 0 : index
    %138 = vector.load %arg10[%137, %c0_51] : memref<8x32xf32, #tpu.memory_space<vmem>>, vector<1x32xf32>
    tpu.vector_store %arg10[%137, %c0_51], %136 {strides = array<i32>} : memref<8x32xf32, #tpu.memory_space<vmem>>, vector<1x32xf32>,
    %c4_i32 = arith.constant 4 : i32
    %139 = arith.index_cast %c4_i32 : i32 to index
    %c0_52 = arith.constant 0 : index
    %140 = vector.load %arg11[%139, %c0_52] : memref<8x128xf32, #tpu.memory_space<vmem>>, vector<1x128xf32>
    %141 = arith.truncf %136 : vector<1x32xf32> to vector<1x32xbf16>
    %cst_53 = arith.constant dense<0.000000e+00> : vector<1x128xf32>
    %142 = tpu.matmul %141, %48, %cst_53 {dimension_numbers = #tpu.dot_dimension_numbers<[1], [0], [0], [1], [0, 0, 1, 1], [], []>} : vector<1x32xbf16>, vector<32x128xbf16>, vector<1x128xf32> -> vector<1x128xf32>
    %143 = arith.addf %140, %142 : vector<1x128xf32>
    %144 = arith.negf %143 : vector<1x128xf32>
    %145 = math.exp %144 : vector<1x128xf32>
    %cst_54 = arith.constant 1.000000e+00 : f32
    %146 = vector.broadcast %cst_54 : f32 to vector<1x128xf32>
    %147 = arith.addf %146, %145 : vector<1x128xf32>
    %148 = arith.divf %146, %147 : vector<1x128xf32>
    %149 = vector.extract_strided_slice %143 {offsets = [0, 64], sizes = [1, 32], strides = [1, 1]} : vector<1x128xf32> to vector<1x32xf32>
    %150 = math.tanh %149 : vector<1x32xf32>
    %151 = vector.extract_strided_slice %148 {offsets = [0, 0], sizes = [1, 32], strides = [1, 1]} : vector<1x128xf32> to vector<1x32xf32>
    %152 = vector.extract_strided_slice %148 {offsets = [0, 32], sizes = [1, 32], strides = [1, 1]} : vector<1x128xf32> to vector<1x32xf32>
    %153 = vector.extract_strided_slice %148 {offsets = [0, 96], sizes = [1, 32], strides = [1, 1]} : vector<1x128xf32> to vector<1x32xf32>
    %154 = arith.mulf %152, %134 : vector<1x32xf32>
    %155 = arith.mulf %151, %150 : vector<1x32xf32>
    %156 = arith.addf %154, %155 : vector<1x32xf32>
    %157 = math.tanh %156 : vector<1x32xf32>
    %158 = arith.mulf %153, %157 : vector<1x32xf32>
    %159 = arith.index_cast %c4_i32 : i32 to index
    %c0_55 = arith.constant 0 : index
    %160 = vector.load %arg10[%159, %c0_55] : memref<8x32xf32, #tpu.memory_space<vmem>>, vector<1x32xf32>
    tpu.vector_store %arg10[%159, %c0_55], %158 {strides = array<i32>} : memref<8x32xf32, #tpu.memory_space<vmem>>, vector<1x32xf32>,
    %c5_i32 = arith.constant 5 : i32
    %161 = arith.index_cast %c5_i32 : i32 to index
    %c0_56 = arith.constant 0 : index
    %162 = vector.load %arg11[%161, %c0_56] : memref<8x128xf32, #tpu.memory_space<vmem>>, vector<1x128xf32>
    %163 = arith.truncf %158 : vector<1x32xf32> to vector<1x32xbf16>
    %cst_57 = arith.constant dense<0.000000e+00> : vector<1x128xf32>
    %164 = tpu.matmul %163, %48, %cst_57 {dimension_numbers = #tpu.dot_dimension_numbers<[1], [0], [0], [1], [0, 0, 1, 1], [], []>} : vector<1x32xbf16>, vector<32x128xbf16>, vector<1x128xf32> -> vector<1x128xf32>
    %165 = arith.addf %162, %164 : vector<1x128xf32>
    %166 = arith.negf %165 : vector<1x128xf32>
    %167 = math.exp %166 : vector<1x128xf32>
    %cst_58 = arith.constant 1.000000e+00 : f32
    %168 = vector.broadcast %cst_58 : f32 to vector<1x128xf32>
    %169 = arith.addf %168, %167 : vector<1x128xf32>
    %170 = arith.divf %168, %169 : vector<1x128xf32>
    %171 = vector.extract_strided_slice %165 {offsets = [0, 64], sizes = [1, 32], strides = [1, 1]} : vector<1x128xf32> to vector<1x32xf32>
    %172 = math.tanh %171 : vector<1x32xf32>
    %173 = vector.extract_strided_slice %170 {offsets = [0, 0], sizes = [1, 32], strides = [1, 1]} : vector<1x128xf32> to vector<1x32xf32>
    %174 = vector.extract_strided_slice %170 {offsets = [0, 32], sizes = [1, 32], strides = [1, 1]} : vector<1x128xf32> to vector<1x32xf32>
    %175 = vector.extract_strided_slice %170 {offsets = [0, 96], sizes = [1, 32], strides = [1, 1]} : vector<1x128xf32> to vector<1x32xf32>
    %176 = arith.mulf %174, %156 : vector<1x32xf32>
    %177 = arith.mulf %173, %172 : vector<1x32xf32>
    %178 = arith.addf %176, %177 : vector<1x32xf32>
    %179 = math.tanh %178 : vector<1x32xf32>
    %180 = arith.mulf %175, %179 : vector<1x32xf32>
    %181 = arith.index_cast %c5_i32 : i32 to index
    %c0_59 = arith.constant 0 : index
    %182 = vector.load %arg10[%181, %c0_59] : memref<8x32xf32, #tpu.memory_space<vmem>>, vector<1x32xf32>
    tpu.vector_store %arg10[%181, %c0_59], %180 {strides = array<i32>} : memref<8x32xf32, #tpu.memory_space<vmem>>, vector<1x32xf32>,
    %c6_i32 = arith.constant 6 : i32
    %183 = arith.index_cast %c6_i32 : i32 to index
    %c0_60 = arith.constant 0 : index
    %184 = vector.load %arg11[%183, %c0_60] : memref<8x128xf32, #tpu.memory_space<vmem>>, vector<1x128xf32>
    %185 = arith.truncf %180 : vector<1x32xf32> to vector<1x32xbf16>
    %cst_61 = arith.constant dense<0.000000e+00> : vector<1x128xf32>
    %186 = tpu.matmul %185, %48, %cst_61 {dimension_numbers = #tpu.dot_dimension_numbers<[1], [0], [0], [1], [0, 0, 1, 1], [], []>} : vector<1x32xbf16>, vector<32x128xbf16>, vector<1x128xf32> -> vector<1x128xf32>
    %187 = arith.addf %184, %186 : vector<1x128xf32>
    %188 = arith.negf %187 : vector<1x128xf32>
    %189 = math.exp %188 : vector<1x128xf32>
    %cst_62 = arith.constant 1.000000e+00 : f32
    %190 = vector.broadcast %cst_62 : f32 to vector<1x128xf32>
    %191 = arith.addf %190, %189 : vector<1x128xf32>
    %192 = arith.divf %190, %191 : vector<1x128xf32>
    %193 = vector.extract_strided_slice %187 {offsets = [0, 64], sizes = [1, 32], strides = [1, 1]} : vector<1x128xf32> to vector<1x32xf32>
    %194 = math.tanh %193 : vector<1x32xf32>
    %195 = vector.extract_strided_slice %192 {offsets = [0, 0], sizes = [1, 32], strides = [1, 1]} : vector<1x128xf32> to vector<1x32xf32>
    %196 = vector.extract_strided_slice %192 {offsets = [0, 32], sizes = [1, 32], strides = [1, 1]} : vector<1x128xf32> to vector<1x32xf32>
    %197 = vector.extract_strided_slice %192 {offsets = [0, 96], sizes = [1, 32], strides = [1, 1]} : vector<1x128xf32> to vector<1x32xf32>
    %198 = arith.mulf %196, %178 : vector<1x32xf32>
    %199 = arith.mulf %195, %194 : vector<1x32xf32>
    %200 = arith.addf %198, %199 : vector<1x32xf32>
    %201 = math.tanh %200 : vector<1x32xf32>
    %202 = arith.mulf %197, %201 : vector<1x32xf32>
    %203 = arith.index_cast %c6_i32 : i32 to index
    %c0_63 = arith.constant 0 : index
    %204 = vector.load %arg10[%203, %c0_63] : memref<8x32xf32, #tpu.memory_space<vmem>>, vector<1x32xf32>
    tpu.vector_store %arg10[%203, %c0_63], %202 {strides = array<i32>} : memref<8x32xf32, #tpu.memory_space<vmem>>, vector<1x32xf32>,
    %c7_i32 = arith.constant 7 : i32
    %205 = arith.index_cast %c7_i32 : i32 to index
    %c0_64 = arith.constant 0 : index
    %206 = vector.load %arg11[%205, %c0_64] : memref<8x128xf32, #tpu.memory_space<vmem>>, vector<1x128xf32>
    %207 = arith.truncf %202 : vector<1x32xf32> to vector<1x32xbf16>
    %cst_65 = arith.constant dense<0.000000e+00> : vector<1x128xf32>
    %208 = tpu.matmul %207, %48, %cst_65 {dimension_numbers = #tpu.dot_dimension_numbers<[1], [0], [0], [1], [0, 0, 1, 1], [], []>} : vector<1x32xbf16>, vector<32x128xbf16>, vector<1x128xf32> -> vector<1x128xf32>
    %209 = arith.addf %206, %208 : vector<1x128xf32>
    %210 = arith.negf %209 : vector<1x128xf32>
    %211 = math.exp %210 : vector<1x128xf32>
    %cst_66 = arith.constant 1.000000e+00 : f32
    %212 = vector.broadcast %cst_66 : f32 to vector<1x128xf32>
    %213 = arith.addf %212, %211 : vector<1x128xf32>
    %214 = arith.divf %212, %213 : vector<1x128xf32>
    %215 = vector.extract_strided_slice %209 {offsets = [0, 64], sizes = [1, 32], strides = [1, 1]} : vector<1x128xf32> to vector<1x32xf32>
    %216 = math.tanh %215 : vector<1x32xf32>
    %217 = vector.extract_strided_slice %214 {offsets = [0, 0], sizes = [1, 32], strides = [1, 1]} : vector<1x128xf32> to vector<1x32xf32>
    %218 = vector.extract_strided_slice %214 {offsets = [0, 32], sizes = [1, 32], strides = [1, 1]} : vector<1x128xf32> to vector<1x32xf32>
    %219 = vector.extract_strided_slice %214 {offsets = [0, 96], sizes = [1, 32], strides = [1, 1]} : vector<1x128xf32> to vector<1x32xf32>
    %220 = arith.mulf %218, %200 : vector<1x32xf32>
    %221 = arith.mulf %217, %216 : vector<1x32xf32>
    %222 = arith.addf %220, %221 : vector<1x32xf32>
    %223 = math.tanh %222 : vector<1x32xf32>
    %224 = arith.mulf %219, %223 : vector<1x32xf32>
    %225 = arith.index_cast %c7_i32 : i32 to index
    %c0_67 = arith.constant 0 : index
    %226 = vector.load %arg10[%225, %c0_67] : memref<8x32xf32, #tpu.memory_space<vmem>>, vector<1x32xf32>
    tpu.vector_store %arg10[%225, %c0_67], %224 {strides = array<i32>} : memref<8x32xf32, #tpu.memory_space<vmem>>, vector<1x32xf32>,
    %c8_i32 = arith.constant 8 : i32
    %c0_68 = arith.constant 0 : index
    %c0_69 = arith.constant 0 : index
    %227 = vector.load %arg10[%c0_68, %c0_69] : memref<8x32xf32, #tpu.memory_space<vmem>>, vector<8x32xf32>
    %228 = arith.truncf %227 : vector<8x32xf32> to vector<8x32xbf16>
    %c0_70 = arith.constant 0 : index
    %c0_71 = arith.constant 0 : index
    %229 = vector.load %arg6[%c0_70, %c0_71] : memref<32x8xbf16, #tpu.memory_space<vmem>>, vector<32x8xbf16>
    %cst_72 = arith.constant dense<0.000000e+00> : vector<8x8xf32>
    %230 = tpu.matmul %228, %229, %cst_72 {dimension_numbers = #tpu.dot_dimension_numbers<[1], [0], [0], [1], [0, 0, 1, 1], [], []>} : vector<8x32xbf16>, vector<32x8xbf16>, vector<8x8xf32> -> vector<8x8xf32>
    %c0_73 = arith.constant 0 : index
    %c0_74 = arith.constant 0 : index
    %231 = vector.load %arg7[%c0_73, %c0_74] : memref<1x8xf32, #tpu.memory_space<vmem>>, vector<1x8xf32>
    %232 = vector.broadcast %231 : vector<1x8xf32> to vector<8x8xf32>
    %233 = arith.addf %230, %232 : vector<8x8xf32>
    %cst_75 = arith.constant dense<0xFF800000> : vector<8xf32>
    %234 = vector.multi_reduction <maximumf>, %233, %cst_75 [1] : vector<8x8xf32> to vector<8xf32>
    %235 = vector.shape_cast %234 : vector<8xf32> to vector<8x1xf32>
    %236 = vector.broadcast %235 : vector<8x1xf32> to vector<8x8xf32>
    %237 = arith.subf %233, %236 : vector<8x8xf32>
    %238 = math.exp %237 : vector<8x8xf32>
    %cst_76 = arith.constant dense<0.000000e+00> : vector<8xf32>
    %239 = vector.multi_reduction <add>, %238, %cst_76 [1] : vector<8x8xf32> to vector<8xf32>
    %240 = vector.shape_cast %239 : vector<8xf32> to vector<8x1xf32>
    %241 = math.log %240 : vector<8x1xf32>
    %242 = vector.broadcast %241 : vector<8x1xf32> to vector<8x8xf32>
    %243 = arith.subf %237, %242 : vector<8x8xf32>
    %c0_77 = arith.constant 0 : index
    %c0_78 = arith.constant 0 : index
    %c0_79 = arith.constant 0 : index
    %244 = vector.load %arg8[%c0_77, %c0_78, %c0_79] : memref<1x8x8xf32, #tpu.memory_space<vmem>>, vector<1x8x8xf32>
    %245 = vector.shape_cast %244 : vector<1x8x8xf32> to vector<8x8xf32>
    %246 = vector.shape_cast %243 : vector<8x8xf32> to vector<1x8x8xf32>
    tpu.vector_store %arg8[%c0_77, %c0_78, %c0_79], %246 {strides = array<i32>} : memref<1x8x8xf32, #tpu.memory_space<vmem>>, vector<1x8x8xf32>,
    return
  }
  func.func @transform_0(%arg0: i32, %arg1: memref<4x8xi32, #tpu.memory_space<smem>>) -> (i32, i32) {
    %c0_i32 = arith.constant 0 : i32
    %c0_i32_0 = arith.constant 0 : i32
    %c0_i32_1 = arith.constant 0 : i32
    return %c0_i32, %c0_i32_0 : i32, i32
  }
  func.func @transform_1(%arg0: i32, %arg1: memref<4x8xi32, #tpu.memory_space<smem>>) -> (i32, i32) {
    %c0_i32 = arith.constant 0 : i32
    %c0_i32_0 = arith.constant 0 : i32
    %c0_i32_1 = arith.constant 0 : i32
    return %c0_i32, %c0_i32_0 : i32, i32
  }
  func.func @transform_2(%arg0: i32, %arg1: memref<4x8xi32, #tpu.memory_space<smem>>) -> (i32, i32) {
    %c0_i32 = arith.constant 0 : i32
    %c0_i32_0 = arith.constant 0 : i32
    %c0_i32_1 = arith.constant 0 : i32
    return %c0_i32, %c0_i32_0 : i32, i32
  }
  func.func @transform_3(%arg0: i32, %arg1: memref<4x8xi32, #tpu.memory_space<smem>>) -> (i32, i32) {
    %c0_i32 = arith.constant 0 : i32
    %c0_i32_0 = arith.constant 0 : i32
    %c0_i32_1 = arith.constant 0 : i32
    return %c0_i32, %c0_i32_0 : i32, i32
  }
  func.func @transform_4(%arg0: i32, %arg1: memref<4x8xi32, #tpu.memory_space<smem>>) -> (i32, i32) {
    %c0_i32 = arith.constant 0 : i32
    %c0_i32_0 = arith.constant 0 : i32
    %c0_i32_1 = arith.constant 0 : i32
    return %c0_i32, %c0_i32_0 : i32, i32
  }
  func.func @transform_5(%arg0: i32, %arg1: memref<4x8xi32, #tpu.memory_space<smem>>) -> (i32, i32) {
    %c0_i32 = arith.constant 0 : i32
    %c0_i32_0 = arith.constant 0 : i32
    %c0_i32_1 = arith.constant 0 : i32
    return %c0_i32, %c0_i32_0 : i32, i32
  }
  func.func @transform_6(%arg0: i32, %arg1: memref<4x8xi32, #tpu.memory_space<smem>>) -> (i32, i32, i32) {
    %c0_i32 = arith.constant 0 : i32
    %c0_i32_0 = arith.constant 0 : i32
    %c0_i32_1 = arith.constant 0 : i32
    return %arg0, %c0_i32, %c0_i32_0 : i32, i32, i32
  }
}

</mosaic_0001>

<llo_original>
// kernel: lstm_forward.1
$region0: #{lstm_forward.1}
  #allocation0 [shape = 'u32[]', space=smem, size = 0x4, offset = 0x4, fixed_abs, tag = 'smem constant byte address 0x4 - core index']
  #allocation1 [shape = 'u32[72,128]{1,0:T(1,128)}', space=vmem, size = 0x9000, scoped, tag = 'internal scratch']
  #allocation2 [shape = 'f32[8,32]{1,0:T(8,128)}', space=vmem, size = 0x1000, scoped, tag = 'scratch operand']
  #allocation3 [shape = 'f32[8,32]{1,0:T(8,128)}', space=vmem, size = 0x1000, scoped, tag = 'scratch operand']
  #allocation4 [shape = 'f32[8,128]{1,0:T(8,128)}', space=vmem, size = 0x1000, scoped, tag = 'scratch operand']
  #allocation5 [shape = 's32[1]{0}', space=sflag, size = 0x4, scoped, tag = 'scoped memory for lstm_forward.1']
  #allocation6 [shape = 'u8[2048]{0}', space=smem, size = 0x800, scoped, tag = 'prefetched SMEM operand 0']
  %s0 = inlined_call_operand.vmem [shape: s32[4,8], index: 0, kind: input, shape index: {}]
  %s1 = inlined_call_operand.vmem [shape: f32[16,32], index: 1, kind: input, shape index: {}]
  %s2 = inlined_call_operand.hbm [shape: bf16[32,128], index: 2, kind: input, shape index: {}]
  %s3 = inlined_call_operand.hbm [shape: bf16[32,128], index: 3, kind: input, shape index: {}]
  %s4 = inlined_call_operand.vmem [shape: f32[1,128], index: 4, kind: input, shape index: {}]
  %s5 = inlined_call_operand.vmem [shape: bf16[32,8], index: 5, kind: input, shape index: {}]
  %s6 = inlined_call_operand.hbm [shape: f32[1,8], index: 6, kind: input, shape index: {}]
  %s7 = inlined_call_operand.hbm [shape: f32[4,8,8], index: 7, kind: output, shape index: {}]
  %s8 = sld [smem:[#allocation0]]
  $region69: #{lstm_forward.1} parent=0
    _
  %s10 = ssub.s32 1, %s8
  %s11 = scalar_select 0, %s10, %s8
  %s13 = sshll.u32 %s0, 4
  %s14 = int_to_ptr.vmem [resolvable:$true] %s13
  %16 = dma.vmem_to_smem %s14, 64, [#allocation6], [#allocation5]
  %18 = dma.done [#allocation5], 64
  %19 = sfence
  $region1: #{lstm_forward.1} parent=0
    #allocation7 [shape = 'u8[8192]{0}', space=vmem, size = 0x2000, scoped, tag = 'input window, operand 2, single buffered']
    #allocation8 [shape = 's32[2]{0}', space=sflag, size = 0x8, scoped, tag = 'scoped memory for lstm_forward.1']
    #allocation9 [shape = 's32[2]{0}', space=sflag, size = 0x8, scoped, tag = 'scoped memory for lstm_forward.1']
    #allocation10 [shape = 'u8[8192]{0}', space=vmem, size = 0x2000, scoped, tag = 'input window, operand 3, single buffered']
    #allocation11 [shape = 's32[1]{0}', space=sflag, size = 0x4, scoped, tag = 'scoped memory for lstm_forward.1']
    #allocation12 [shape = 'u8[512]{0}', space=vmem, size = 0x400, scoped, tag = 'input window, operand 6, single buffered']
    #allocation13 [shape = 'u8[8192]{0}', space=vmem, size = 0x2000, scoped, tag = 'output window, operand 0']
    %20 = vsyncpa [#allocation8], 0
    %21 = vsyncpa [#allocation11], 0
    %22 = vsyncpa [#allocation9], 0
    %s23 = scalar_lea.sflag [#allocation9], 1
    %24 = vsyncpa %s23, 0
    loop: start=0, step=1, limit=6
    $region2: #{lstm_forward.1} parent=1 // loop_pre_header
      _
    $region3: #{lstm_forward.1} parent=1 // loop_header
      %s26 = sphi 0, %s30
      %p27 = scmp.ge.s32.totalorder %s26, 6
      %s34 = sphi 0, %s34
      %s36 = sphi 0, %s34
      %s37 = sphi 0, %s36
      %s51 = sphi 0, %s37
      %s55 = sphi 0, %s55
      %s57 = sphi 0, %s55
      %s58 = sphi 0, %s57
      %s72 = sphi 0, %s58
      %s76 = sphi 0, %s76
      %s78 = sphi 0, %s76
      %s79 = sphi 0, %s78
      %s93 = sphi 0, %s79
      %s97 = sphi 0, %s97
      %s99 = sphi 0, %s97
      %s100 = sphi 0, %s99
      %s114 = sphi 0, %s100
      %s118 = sphi 0, %s118
      %s120 = sphi 0, %s118
      %s121 = sphi 0, %s120
      %s135 = sphi 0, %s121
      %s139 = sphi 0, %s139
      %s141 = sphi 0, %s139
      %s142 = sphi 0, %s141
      %s156 = sphi 0, %s142
      %s162 = sphi 0, %s164
      %s165 = sphi 0, %s162
      %s166 = sphi 0, %s165
      %s182 = sphi 0, %s166
    $region4: #{lstm_forward.1} parent=1 // loop_header_branch
      %29 = sbr.rel (%p27) target = $region8
    $region5: #{lstm_forward.1} parent=1 // loop_body
      %s31 = ssub.s32 %s26, 1
      %s32 = ssub.s32 %s26, 2
      %s33 = sadd.s32 %s26, 1
      %s35 = sadd.s32 %s34, 1
      %p38 = scmp.eq.s32.totalorder %s26, 3
      %p39 = scmp.ne.s32.totalorder %s34, %s36
      %p40 = scmp.eq.s32.totalorder %s26, 0
      %p41 = por %p39, %p40
      %p42 = scmp.ne.s32.totalorder %s34, %s36
      %p43 = scmp.eq.s32.totalorder %s31, 3
      %p44 = por %p42, %p43
      %p45 = scmp.ne.s32.totalorder %s36, %s37
      %p46 = scmp.eq.s32.totalorder %s31, 0
      %p47 = por %p45, %p46
      %p48 = scmp.ne.s32.totalorder %s36, %s37
      %p49 = scmp.eq.s32.totalorder %s32, 3
      %p50 = por %p48, %p49
      %p52 = scmp.ne.s32.totalorder %s37, %s51
      %p53 = scmp.eq.s32.totalorder %s32, 0
      %p54 = por %p52, %p53
      %s56 = sadd.s32 %s55, 1
      %p59 = scmp.eq.s32.totalorder %s26, 3
      %p60 = scmp.ne.s32.totalorder %s55, %s57
      %p61 = scmp.eq.s32.totalorder %s26, 0
      %p62 = por %p60, %p61
      %p63 = scmp.ne.s32.totalorder %s55, %s57
      %p64 = scmp.eq.s32.totalorder %s31, 3
      %p65 = por %p63, %p64
      %p66 = scmp.ne.s32.totalorder %s57, %s58
      %p67 = scmp.eq.s32.totalorder %s31, 0
      %p68 = por %p66, %p67
      %p69 = scmp.ne.s32.totalorder %s57, %s58
      %p70 = scmp.eq.s32.totalorder %s32, 3
      %p71 = por %p69, %p70
      %p73 = scmp.ne.s32.totalorder %s58, %s72
      %p74 = scmp.eq.s32.totalorder %s32, 0
      %p75 = por %p73, %p74
      %s77 = sadd.s32 %s76, 1
      %p80 = scmp.eq.s32.totalorder %s26, 3
      %p81 = scmp.ne.s32.totalorder %s76, %s78
      %p82 = scmp.eq.s32.totalorder %s26, 0
      %p83 = por %p81, %p82
      %p84 = scmp.ne.s32.totalorder %s76, %s78
      %p85 = scmp.eq.s32.totalorder %s31, 3
      %p86 = por %p84, %p85
      %p87 = scmp.ne.s32.totalorder %s78, %s79
      %p88 = scmp.eq.s32.totalorder %s31, 0
      %p89 = por %p87, %p88
      %p90 = scmp.ne.s32.totalorder %s78, %s79
      %p91 = scmp.eq.s32.totalorder %s32, 3
      %p92 = por %p90, %p91
      %p94 = scmp.ne.s32.totalorder %s79, %s93
      %p95 = scmp.eq.s32.totalorder %s32, 0
      %p96 = por %p94, %p95
      %s98 = sadd.s32 %s97, 1
      %p101 = scmp.eq.s32.totalorder %s26, 3
      %p102 = scmp.ne.s32.totalorder %s97, %s99
      %p103 = scmp.eq.s32.totalorder %s26, 0
      %p104 = por %p102, %p103
      %p105 = scmp.ne.s32.totalorder %s97, %s99
      %p106 = scmp.eq.s32.totalorder %s31, 3
      %p107 = por %p105, %p106
      %p108 = scmp.ne.s32.totalorder %s99, %s100
      %p109 = scmp.eq.s32.totalorder %s31, 0
      %p110 = por %p108, %p109
      %p111 = scmp.ne.s32.totalorder %s99, %s100
      %p112 = scmp.eq.s32.totalorder %s32, 3
      %p113 = por %p111, %p112
      %p115 = scmp.ne.s32.totalorder %s100, %s114
      %p116 = scmp.eq.s32.totalorder %s32, 0
      %p117 = por %p115, %p116
      %s119 = sadd.s32 %s118, 1
      %p122 = scmp.eq.s32.totalorder %s26, 3
      %p123 = scmp.ne.s32.totalorder %s118, %s120
      %p124 = scmp.eq.s32.totalorder %s26, 0
      %p125 = por %p123, %p124
      %p126 = scmp.ne.s32.totalorder %s118, %s120
      %p127 = scmp.eq.s32.totalorder %s31, 3
      %p128 = por %p126, %p127
      %p129 = scmp.ne.s32.totalorder %s120, %s121
      %p130 = scmp.eq.s32.totalorder %s31, 0
      %p131 = por %p129, %p130
      %p132 = scmp.ne.s32.totalorder %s120, %s121
      %p133 = scmp.eq.s32.totalorder %s32, 3
      %p134 = por %p132, %p133
      %p136 = scmp.ne.s32.totalorder %s121, %s135
      %p137 = scmp.eq.s32.totalorder %s32, 0
      %p138 = por %p136, %p137
      %s140 = sadd.s32 %s139, 1
      %p143 = scmp.eq.s32.totalorder %s26, 3
      %p144 = scmp.ne.s32.totalorder %s139, %s141
      %p145 = scmp.eq.s32.totalorder %s26, 0
      %p146 = por %p144, %p145
      %p147 = scmp.ne.s32.totalorder %s139, %s141
      %p148 = scmp.eq.s32.totalorder %s31, 3
      %p149 = por %p147, %p148
      %p150 = scmp.ne.s32.totalorder %s141, %s142
      %p151 = scmp.eq.s32.totalorder %s31, 0
      %p152 = por %p150, %p151
      %p153 = scmp.ne.s32.totalorder %s141, %s142
      %p154 = scmp.eq.s32.totalorder %s32, 3
      %p155 = por %p153, %p154
      %p157 = scmp.ne.s32.totalorder %s142, %s156
      %p158 = scmp.eq.s32.totalorder %s32, 0
      %p159 = por %p157, %p158
      %s160 = ssub.s32 %s26, %s33
      %p161 = scmp.eq.s32.totalorder %s160, 0
      %s163 = sadd.s32 %s162, 1
      %s164 = scalar_select %p161, %s162, %s163
      %p167 = pneg %p161
      %p168 = scmp.eq.s32.totalorder %s26, 3
      %p169 = por %p167, %p168
      %p170 = scmp.ne.s32.totalorder %s162, %s165
      %p171 = scmp.eq.s32.totalorder %s26, 0
      %p172 = por %p170, %p171
      %p173 = scmp.ne.s32.totalorder %s162, %s165
      %p174 = scmp.eq.s32.totalorder %s31, 3
      %p175 = por %p173, %p174
      %p176 = scmp.ne.s32.totalorder %s165, %s166
      %p177 = scmp.eq.s32.totalorder %s31, 0
      %p178 = por %p176, %p177
      %p179 = scmp.ne.s32.totalorder %s165, %s166
      %p180 = scmp.eq.s32.totalorder %s32, 3
      %p181 = por %p179, %p180
      %p183 = scmp.ne.s32.totalorder %s166, %s182
      %p184 = scmp.eq.s32.totalorder %s32, 0
      %p185 = por %p183, %p184
      %p186 = scmp.le.s32.totalorder 1, %s26
      %p187 = scmp.lt.s32.totalorder %s26, 5
      %p188 = pnand %p186, %p187
      %p189 = pneg %p188
      // Predicated region
      $region9: #{lstm_forward.1} parent=5 // pred_check
        _
      $region10: #{lstm_forward.1} parent=5 // pred_check_branch
        %191 = sbr.rel (%p188) target = $region12
      $region11: #{lstm_forward.1} parent=5 // pred_region
        %s192 = ssub.s32 %s26, 1
        // Predicated region
        $region13: #{lstm_forward.1} parent=11 // pred_check
          %p193 = pneg %p47
        $region14: #{lstm_forward.1} parent=11 // pred_check_branch
          %195 = sbr.rel (%p193) target = $region16
        $region15: #{lstm_forward.1} parent=11 // pred_region
          _
        $region16: #{lstm_forward.1} parent=11 // pred_fallthru
          _
        // Predicated region
        $region17: #{lstm_forward.1} parent=11 // pred_check
          %p196 = pneg %p68
        $region18: #{lstm_forward.1} parent=11 // pred_check_branch
          %198 = sbr.rel (%p196) target = $region20
        $region19: #{lstm_forward.1} parent=11 // pred_region
          %200 = vsyncadd [#allocation8], 0
          %s201 = sshll.u32 %s2, 4
          %s202 = int_to_ptr.hbm [resolvable:$true] %s201
          %s203 = sshll.u32 [#allocation7], 4
          %s204 = int_to_ptr.vmem [resolvable:$true] %s203
          %209 = dma.hbm_to_vmem [thread:$0]  %s202, 256, %s204, [#allocation8], 64, 64, 4
        $region20: #{lstm_forward.1} parent=11 // pred_fallthru
          _
        // Predicated region
        $region21: #{lstm_forward.1} parent=11 // pred_check
          %p210 = pneg %p89
        $region22: #{lstm_forward.1} parent=11 // pred_check_branch
          %212 = sbr.rel (%p210) target = $region24
        $region23: #{lstm_forward.1} parent=11 // pred_region
          %214 = vsyncadd [#allocation11], 0
          %s215 = sshll.u32 %s3, 4
          %s216 = int_to_ptr.hbm [resolvable:$true] %s215
          %s217 = sshll.u32 [#allocation10], 4
          %s218 = int_to_ptr.vmem [resolvable:$true] %s217
          %223 = dma.hbm_to_vmem [thread:$0]  %s216, 256, %s218, [#allocation11], 64, 64, 4
        $region24: #{lstm_forward.1} parent=11 // pred_fallthru
          _
        // Predicated region
        $region25: #{lstm_forward.1} parent=11 // pred_check
          %p224 = pneg %p110
        $region26: #{lstm_forward.1} parent=11 // pred_check_branch
          %226 = sbr.rel (%p224) target = $region28
        $region27: #{lstm_forward.1} parent=11 // pred_region
          _
        $region28: #{lstm_forward.1} parent=11 // pred_fallthru
          _
        // Predicated region
        $region29: #{lstm_forward.1} parent=11 // pred_check
          %p227 = pneg %p131
        $region30: #{lstm_forward.1} parent=11 // pred_check_branch
          %229 = sbr.rel (%p227) target = $region32
        $region31: #{lstm_forward.1} parent=11 // pred_region
          _
        $region32: #{lstm_forward.1} parent=11 // pred_fallthru
          _
        // Predicated region
        $region33: #{lstm_forward.1} parent=11 // pred_check
          %p230 = pneg %p152
        $region34: #{lstm_forward.1} parent=11 // pred_check_branch
          %232 = sbr.rel (%p230) target = $region36
        $region35: #{lstm_forward.1} parent=11 // pred_region
          %234 = vsyncadd [#allocation11], 0
          %s236 = sshll.u32 %s6, 4
          %s237 = int_to_ptr.hbm [resolvable:$true] %s236
          %s238 = sshll.u32 [#allocation12], 4
          %s239 = int_to_ptr.vmem [resolvable:$true] %s238
          %241 = dma.hbm_to_vmem [thread:$0]  %s237, 16, %s239, [#allocation11]
        $region36: #{lstm_forward.1} parent=11 // pred_fallthru
          _
      $region12: #{lstm_forward.1} parent=5 // pred_fallthru
        _
      %p242 = scmp.lt.s32.totalorder %s26, 4
      // Predicated region
      $region37: #{lstm_forward.1} parent=5 // pred_check
        %p243 = pneg %p242
      $region38: #{lstm_forward.1} parent=5 // pred_check_branch
        %245 = sbr.rel (%p243) target = $region40
      $region39: #{lstm_forward.1} parent=5 // pred_region
        _
      $region40: #{lstm_forward.1} parent=5 // pred_fallthru
        _
      %p246 = scmp.le.s32.totalorder 1, %s26
      %p247 = scmp.lt.s32.totalorder %s26, 5
      %p248 = pnand %p246, %p247
      %p249 = pneg %p248
      // Predicated region
      $region41: #{lstm_forward.1} parent=5 // pred_check
        _
      $region42: #{lstm_forward.1} parent=5 // pred_check_branch
        %251 = sbr.rel (%p248) target = $region44
      $region43: #{lstm_forward.1} parent=5 // pred_region
        %s252 = ssub.s32 %s26, 1
        // Predicated region
        $region45: #{lstm_forward.1} parent=43 // pred_check
          %p253 = pneg %p68
        $region46: #{lstm_forward.1} parent=43 // pred_check_branch
          %255 = sbr.rel (%p253) target = $region48
        $region47: #{lstm_forward.1} parent=43 // pred_region
          %257 = dma.done [#allocation8], 256
        $region48: #{lstm_forward.1} parent=43 // pred_fallthru
          _
        // Predicated region
        $region49: #{lstm_forward.1} parent=43 // pred_check
          %p258 = pneg %p89
        $region50: #{lstm_forward.1} parent=43 // pred_check_branch
          %260 = sbr.rel (%p258) target = $region52
        $region51: #{lstm_forward.1} parent=43 // pred_region
          %262 = dma.done [#allocation11], 256
        $region52: #{lstm_forward.1} parent=43 // pred_fallthru
          _
        // Predicated region
        $region53: #{lstm_forward.1} parent=43 // pred_check
          %p263 = pneg %p152
        $region54: #{lstm_forward.1} parent=43 // pred_check_branch
          %265 = sbr.rel (%p263) target = $region56
        $region55: #{lstm_forward.1} parent=43 // pred_region
          %267 = dma.done [#allocation11], 16
        $region56: #{lstm_forward.1} parent=43 // pred_fallthru
          _
        %p268 = pneg %p47
        %p269 = pneg %p44
        %p270 = pneg %p68
        %p271 = pneg %p65
        %p272 = pneg %p89
        %p273 = pneg %p86
        %p274 = pneg %p110
        %p275 = pneg %p107
        %p276 = pneg %p131
        %p277 = pneg %p128
        %p278 = pneg %p152
        %p279 = pneg %p149
        %p280 = pneg %p178
        %p281 = pneg %p175
        %s282 = sand.u32 %s165, 1
        %s283 = scalar_lea.sflag [#allocation9], %s282
        %s284 = sand.u32 %s165, 1
        %s285 = smul.addr %s284, 8
        %s286 = scalar_lea.vmem [#allocation13], %s285
        %s288 = smul.u32 %s31, 128
        %s289 = sld [smem:[#allocation6 + %s288]]
        %s290 = scalar_lea.vmem %s1, %s289
        %v291 = vld [vmem:[%s290] sm:$0x1]
        %vm292 = vcmask 253952
        %293 = vst.msk [vmem:[#allocation2] sm:$0x1] %vm292, %v291
        %s294 = sadd.s32 %s288, 1
        %s295 = sld [smem:[#allocation6 + %s294]]
        %s296 = scalar_lea.vmem %s1, %s295
        %v297 = vld [vmem:[%s296] sm:$0x1]
        %298 = vst.msk [vmem:[#allocation2 + $0x1] sm:$0x1] %vm292, %v297
        %s299 = sadd.s32 %s288, 2
        %s300 = sld [smem:[#allocation6 + %s299]]
        %s301 = scalar_lea.vmem %s1, %s300
        %v302 = vld [vmem:[%s301] sm:$0x1]
        %303 = vst.msk [vmem:[#allocation2 + $0x2] sm:$0x1] %vm292, %v302
        %s304 = sadd.s32 %s288, 3
        %s305 = sld [smem:[#allocation6 + %s304]]
        %s306 = scalar_lea.vmem %s1, %s305
        %v307 = vld [vmem:[%s306] sm:$0x1]
        %308 = vst.msk [vmem:[#allocation2 + $0x3] sm:$0x1] %vm292, %v307
        %s309 = sadd.s32 %s288, 4
        %s310 = sld [smem:[#allocation6 + %s309]]
        %s311 = scalar_lea.vmem %s1, %s310
        %v312 = vld [vmem:[%s311] sm:$0x1]
        %313 = vst.msk [vmem:[#allocation2 + $0x4] sm:$0x1] %vm292, %v312
        %s314 = sadd.s32 %s288, 5
        %s315 = sld [smem:[#allocation6 + %s314]]
        %s316 = scalar_lea.vmem %s1, %s315
        %v317 = vld [vmem:[%s316] sm:$0x1]
        %318 = vst.msk [vmem:[#allocation2 + $0x5] sm:$0x1] %vm292, %v317
        %s319 = sadd.s32 %s288, 6
        %s320 = sld [smem:[#allocation6 + %s319]]
        %s321 = scalar_lea.vmem %s1, %s320
        %v322 = vld [vmem:[%s321] sm:$0x1]
        %323 = vst.msk [vmem:[#allocation2 + $0x6] sm:$0x1] %vm292, %v322
        %s324 = sadd.s32 %s288, 7
        %s325 = sld [smem:[#allocation6 + %s324]]
        %s326 = scalar_lea.vmem %s1, %s325
        %v327 = vld [vmem:[%s326] sm:$0x1]
        %328 = vst.msk [vmem:[#allocation2 + $0x7] sm:$0x1] %vm292, %v327
        %v329 = vld [vmem:[#allocation2] sm:$0xff]
        %v330 = vpack.c.bf16 %v329, %v329
        %v331 = vld [vmem:[#allocation7] sm:$0xf]
        %v332 = vld [vmem:[#allocation7 + $0x4] sm:$0xf]
        %v333 = vld [vmem:[#allocation7 + $0x8] sm:$0xf]
        %v334 = vld [vmem:[#allocation7 + $0xc] sm:$0xf]
        %v335 = vld [vmem:[%s4] sm:$0x1]
        %v337 = vperm.slane %v335, 0
        %v343 = vunpack.c.l.b16 %v331
        %v344 = vunpack.c.l.b16 %v332
        %v345 = vunpack.c.l.b16 %v333
        %v346 = vunpack.c.l.b16 %v334
        %v347 = vpack.c.b16 %v344, %v343
        %v348 = vpack.c.b16 %v346, %v345
        %vm351 = vcmask 261120
        %v353 = vsel %vm351, %v330, 0
        %355 = vmatpush.bf16.msra.mxu0 0
        %356 = vmatpush.bf16.msra.mxu0 0
        %357 = vmatpush.bf16.msra.mxu0 0
        %358 = vmatpush.bf16.msra.mxu0 0
        %359 = vmatpush.bf16.msra.mxu0 0
        %360 = vmatpush.bf16.msra.mxu0 0
        %361 = vmatpush.bf16.msra.mxu0 %v348
        %362 = vmatpush.bf16.msra.mxu0 %v347
        %363 = vmatmul.bf16.gmra.mxu0 %v353
        %v364 = vpop.f32.mrf.mxu0
        %v365 = vadd.f32 %v337, %v364
        %v366 = vpop.f32.mrf.mxu0
        %367 = vdwg.mxu0
        %368 = vst [vmem:[#allocation4] sm:$0xff] %v365
        %v369 = vld [vmem:[#allocation10] sm:$0xf]
        %v370 = vld [vmem:[#allocation10 + $0x4] sm:$0xf]
        %v371 = vld [vmem:[#allocation10 + $0x8] sm:$0xf]
        %v372 = vld [vmem:[#allocation10 + $0xc] sm:$0xf]
        %v373 = vld [vmem:[#allocation4] sm:$0x1]
        %v378 = vunpack.c.l.b16 %v369
        %v379 = vunpack.c.l.b16 %v370
        %v380 = vunpack.c.l.b16 %v371
        %v381 = vunpack.c.l.b16 %v372
        %v382 = vpack.c.b16 %v379, %v378
        %v383 = vpack.c.b16 %v381, %v380
        %v387 = vsel %vm351, 0, 0
        %389 = vmatpush.bf16.msra.mxu0 0
        %390 = vmatpush.bf16.msra.mxu0 0
        %391 = vmatpush.bf16.msra.mxu0 0
        %392 = vmatpush.bf16.msra.mxu0 0
        %393 = vmatpush.bf16.msra.mxu0 0
        %394 = vmatpush.bf16.msra.mxu0 0
        %395 = vmatpush.bf16.msra.mxu0 %v383
        %396 = vmatpush.bf16.msra.mxu0 %v382
        %397 = vmatmul.bf16.gmra.mxu0 %v387
        %v398 = vpop.f32.mrf.mxu0
        %v399 = vadd.f32 0.0, %v398
        %v400 = vpop.f32.mrf.mxu0
        %401 = vdwg.mxu0
        %v402 = vadd.f32 %v373, %v399
        %v403 = vxor.u32 %v402, 2147483648
        %v404 = vmul.f32 %v403, 1.442695
        %v405 = vpow.pop %v404
        %v406 = vadd.f32 %v405, 1.0
        %v407 = vrcp.pop %v406
        %v408 = vmul.f32 %v406, %v407
        %v409 = vsub.f32 1.0, %v408
        %v410 = vmul.f32 %v407, %v409
        %v411 = vadd.f32 %v407, %v410
        %vm412 = vweird.f32 %v406
        %vm413 = vweird.f32 %v407
        %vm414 = vmor %vm412, %vm413
        %v415 = vsel %vm414, %v407, %v411
        %v416 = vand.u32 2147483647, %v406
        %vm417 = vcmp.eq.f32.partialorder %v416, 8.507059e+37
        %v418 = vand.u32 %v406, 2147483648
        %v419 = vor.u32 1.1754944e-38, %v418
        %v420 = vsel %vm417, %v419, %v415
        %v421 = vmul.f32 1.0, %v420
        %v422 = vtanh.pop %v402
        %v423 = vmul.f32 %v421, 0.0
        %425 = vrot.lane.b32.xlu0 %v422, 64
        %v426 = vpop.permute.xlu0 %425
        %v428 = vmul.f32 %v421, %v426
        %430 = vrot.lane.b32.xlu0 %v428, 32
        %v431 = vpop.permute.xlu0 %430
        %v433 = vadd.f32 %v423, %v431
        %v434 = vtanh.pop %v433
        %436 = vrot.lane.b32.xlu0 %v434, 64
        %v437 = vpop.permute.xlu0 %436
        %v439 = vmul.f32 %v421, %v437
        %441 = vrot.lane.b32.xlu0 %v439, 32
        %v442 = vpop.permute.xlu0 %441
        %444 = vst.msk [vmem:[#allocation3] sm:$0x1] %vm292, %v442
        %v445 = vld [vmem:[#allocation4 + $0x1] sm:$0x1]
        %v446 = vpack.c.bf16 %v439, %v439
        %448 = vrot.lane.b32.xlu0 %v446, 32
        %v449 = vpop.permute.xlu0 %448
        %v451 = vsel %vm351, %v449, 0
        %453 = vmatpush.bf16.msra.mxu0 0
        %454 = vmatpush.bf16.msra.mxu0 0
        %455 = vmatpush.bf16.msra.mxu0 0
        %456 = vmatpush.bf16.msra.mxu0 0
        %457 = vmatpush.bf16.msra.mxu0 0
        %458 = vmatpush.bf16.msra.mxu0 0
        %459 = vmatpush.bf16.msra.mxu0 %v383
        %460 = vmatpush.bf16.msra.mxu0 %v382
        %461 = vmatmul.bf16.gmra.mxu0 %v451
        %v462 = vpop.f32.mrf.mxu0
        %v463 = vadd.f32 0.0, %v462
        %v464 = vpop.f32.mrf.mxu0
        %465 = vdwg.mxu0
        %v466 = vadd.f32 %v445, %v463
        %v467 = vxor.u32 %v466, 2147483648
        %v468 = vmul.f32 %v467, 1.442695
        %v469 = vpow.pop %v468
        %v470 = vadd.f32 %v469, 1.0
        %v471 = vrcp.pop %v470
        %v472 = vmul.f32 %v470, %v471
        %v473 = vsub.f32 1.0, %v472
        %v474 = vmul.f32 %v471, %v473
        %v475 = vadd.f32 %v471, %v474
        %vm476 = vweird.f32 %v470
        %vm477 = vweird.f32 %v471
        %vm478 = vmor %vm476, %vm477
        %v479 = vsel %vm478, %v471, %v475
        %v480 = vand.u32 2147483647, %v470
        %vm481 = vcmp.eq.f32.partialorder %v480, 8.507059e+37
        %v482 = vand.u32 %v470, 2147483648
        %v483 = vor.u32 1.1754944e-38, %v482
        %v484 = vsel %vm481, %v483, %v479
        %v485 = vmul.f32 1.0, %v484
        %v486 = vtanh.pop %v466
        %v487 = vmul.f32 %v485, %v433
        %489 = vrot.lane.b32.xlu0 %v486, 64
        %v490 = vpop.permute.xlu0 %489
        %v492 = vmul.f32 %v485, %v490
        %494 = vrot.lane.b32.xlu0 %v492, 32
        %v495 = vpop.permute.xlu0 %494
        %v497 = vadd.f32 %v487, %v495
        %v498 = vtanh.pop %v497
        %500 = vrot.lane.b32.xlu0 %v498, 64
        %v501 = vpop.permute.xlu0 %500
        %v503 = vmul.f32 %v485, %v501
        %505 = vrot.lane.b32.xlu0 %v503, 32
        %v506 = vpop.permute.xlu0 %505
        %508 = vst.msk [vmem:[#allocation3 + $0x1] sm:$0x1] %vm292, %v506
        %v509 = vld [vmem:[#allocation4 + $0x2] sm:$0x1]
        %v510 = vpack.c.bf16 %v503, %v503
        %512 = vrot.lane.b32.xlu0 %v510, 32
        %v513 = vpop.permute.xlu0 %512
        %v515 = vsel %vm351, %v513, 0
        %517 = vmatpush.bf16.msra.mxu0 0
        %518 = vmatpush.bf16.msra.mxu0 0
        %519 = vmatpush.bf16.msra.mxu0 0
        %520 = vmatpush.bf16.msra.mxu0 0
        %521 = vmatpush.bf16.msra.mxu0 0
        %522 = vmatpush.bf16.msra.mxu0 0
        %523 = vmatpush.bf16.msra.mxu0 %v383
        %524 = vmatpush.bf16.msra.mxu0 %v382
        %525 = vmatmul.bf16.gmra.mxu0 %v515
        %v526 = vpop.f32.mrf.mxu0
        %v527 = vadd.f32 0.0, %v526
        %v528 = vpop.f32.mrf.mxu0
        %529 = vdwg.mxu0
        %v530 = vadd.f32 %v509, %v527
        %v531 = vxor.u32 %v530, 2147483648
        %v532 = vmul.f32 %v531, 1.442695
        %v533 = vpow.pop %v532
        %v534 = vadd.f32 %v533, 1.0
        %v535 = vrcp.pop %v534
        %v536 = vmul.f32 %v534, %v535
        %v537 = vsub.f32 1.0, %v536
        %v538 = vmul.f32 %v535, %v537
        %v539 = vadd.f32 %v535, %v538
        %vm540 = vweird.f32 %v534
        %vm541 = vweird.f32 %v535
        %vm542 = vmor %vm540, %vm541
        %v543 = vsel %vm542, %v535, %v539
        %v544 = vand.u32 2147483647, %v534
        %vm545 = vcmp.eq.f32.partialorder %v544, 8.507059e+37
        %v546 = vand.u32 %v534, 2147483648
        %v547 = vor.u32 1.1754944e-38, %v546
        %v548 = vsel %vm545, %v547, %v543
        %v549 = vmul.f32 1.0, %v548
        %v550 = vtanh.pop %v530
        %v551 = vmul.f32 %v549, %v497
        %553 = vrot.lane.b32.xlu0 %v550, 64
        %v554 = vpop.permute.xlu0 %553
        %v556 = vmul.f32 %v549, %v554
        %558 = vrot.lane.b32.xlu0 %v556, 32
        %v559 = vpop.permute.xlu0 %558
        %v561 = vadd.f32 %v551, %v559
        %v562 = vtanh.pop %v561
        %564 = vrot.lane.b32.xlu0 %v562, 64
        %v565 = vpop.permute.xlu0 %564
        %v567 = vmul.f32 %v549, %v565
        %569 = vrot.lane.b32.xlu0 %v567, 32
        %v570 = vpop.permute.xlu0 %569
        %572 = vst.msk [vmem:[#allocation3 + $0x2] sm:$0x1] %vm292, %v570
        %v573 = vld [vmem:[#allocation4 + $0x3] sm:$0x1]
        %v574 = vpack.c.bf16 %v567, %v567
        %576 = vrot.lane.b32.xlu0 %v574, 32
        %v577 = vpop.permute.xlu0 %576
        %v579 = vsel %vm351, %v577, 0
        %581 = vmatpush.bf16.msra.mxu0 0
        %582 = vmatpush.bf16.msra.mxu0 0
        %583 = vmatpush.bf16.msra.mxu0 0
        %584 = vmatpush.bf16.msra.mxu0 0
        %585 = vmatpush.bf16.msra.mxu0 0
        %586 = vmatpush.bf16.msra.mxu0 0
        %587 = vmatpush.bf16.msra.mxu0 %v383
        %588 = vmatpush.bf16.msra.mxu0 %v382
        %589 = vmatmul.bf16.gmra.mxu0 %v579
        %v590 = vpop.f32.mrf.mxu0
        %v591 = vadd.f32 0.0, %v590
        %v592 = vpop.f32.mrf.mxu0
        %593 = vdwg.mxu0
        %v594 = vadd.f32 %v573, %v591
        %v595 = vxor.u32 %v594, 2147483648
        %v596 = vmul.f32 %v595, 1.442695
        %v597 = vpow.pop %v596
        %v598 = vadd.f32 %v597, 1.0
        %v599 = vrcp.pop %v598
        %v600 = vmul.f32 %v598, %v599
        %v601 = vsub.f32 1.0, %v600
        %v602 = vmul.f32 %v599, %v601
        %v603 = vadd.f32 %v599, %v602
        %vm604 = vweird.f32 %v598
        %vm605 = vweird.f32 %v599
        %vm606 = vmor %vm604, %vm605
        %v607 = vsel %vm606, %v599, %v603
        %v608 = vand.u32 2147483647, %v598
        %vm609 = vcmp.eq.f32.partialorder %v608, 8.507059e+37
        %v610 = vand.u32 %v598, 2147483648
        %v611 = vor.u32 1.1754944e-38, %v610
        %v612 = vsel %vm609, %v611, %v607
        %v613 = vmul.f32 1.0, %v612
        %v614 = vtanh.pop %v594
        %v615 = vmul.f32 %v613, %v561
        %617 = vrot.lane.b32.xlu0 %v614, 64
        %v618 = vpop.permute.xlu0 %617
        %v620 = vmul.f32 %v613, %v618
        %622 = vrot.lane.b32.xlu0 %v620, 32
        %v623 = vpop.permute.xlu0 %622
        %v625 = vadd.f32 %v615, %v623
        %v626 = vtanh.pop %v625
        %628 = vrot.lane.b32.xlu0 %v626, 64
        %v629 = vpop.permute.xlu0 %628
        %v631 = vmul.f32 %v613, %v629
        %633 = vrot.lane.b32.xlu0 %v631, 32
        %v634 = vpop.permute.xlu0 %633
        %636 = vst.msk [vmem:[#allocation3 + $0x3] sm:$0x1] %vm292, %v634
        %v637 = vld [vmem:[#allocation4 + $0x4] sm:$0x1]
        %v638 = vpack.c.bf16 %v631, %v631
        %640 = vrot.lane.b32.xlu0 %v638, 32
        %v641 = vpop.permute.xlu0 %640
        %v643 = vsel %vm351, %v641, 0
        %645 = vmatpush.bf16.msra.mxu0 0
        %646 = vmatpush.bf16.msra.mxu0 0
        %647 = vmatpush.bf16.msra.mxu0 0
        %648 = vmatpush.bf16.msra.mxu0 0
        %649 = vmatpush.bf16.msra.mxu0 0
        %650 = vmatpush.bf16.msra.mxu0 0
        %651 = vmatpush.bf16.msra.mxu0 %v383
        %652 = vmatpush.bf16.msra.mxu0 %v382
        %653 = vmatmul.bf16.gmra.mxu0 %v643
        %v654 = vpop.f32.mrf.mxu0
        %v655 = vadd.f32 0.0, %v654
        %v656 = vpop.f32.mrf.mxu0
        %657 = vdwg.mxu0
        %v658 = vadd.f32 %v637, %v655
        %v659 = vxor.u32 %v658, 2147483648
        %v660 = vmul.f32 %v659, 1.442695
        %v661 = vpow.pop %v660
        %v662 = vadd.f32 %v661, 1.0
        %v663 = vrcp.pop %v662
        %v664 = vmul.f32 %v662, %v663
        %v665 = vsub.f32 1.0, %v664
        %v666 = vmul.f32 %v663, %v665
        %v667 = vadd.f32 %v663, %v666
        %vm668 = vweird.f32 %v662
        %vm669 = vweird.f32 %v663
        %vm670 = vmor %vm668, %vm669
        %v671 = vsel %vm670, %v663, %v667
        %v672 = vand.u32 2147483647, %v662
        %vm673 = vcmp.eq.f32.partialorder %v672, 8.507059e+37
        %v674 = vand.u32 %v662, 2147483648
        %v675 = vor.u32 1.1754944e-38, %v674
        %v676 = vsel %vm673, %v675, %v671
        %v677 = vmul.f32 1.0, %v676
        %v678 = vtanh.pop %v658
        %v679 = vmul.f32 %v677, %v625
        %681 = vrot.lane.b32.xlu0 %v678, 64
        %v682 = vpop.permute.xlu0 %681
        %v684 = vmul.f32 %v677, %v682
        %686 = vrot.lane.b32.xlu0 %v684, 32
        %v687 = vpop.permute.xlu0 %686
        %v689 = vadd.f32 %v679, %v687
        %v690 = vtanh.pop %v689
        %692 = vrot.lane.b32.xlu0 %v690, 64
        %v693 = vpop.permute.xlu0 %692
        %v695 = vmul.f32 %v677, %v693
        %697 = vrot.lane.b32.xlu0 %v695, 32
        %v698 = vpop.permute.xlu0 %697
        %700 = vst.msk [vmem:[#allocation3 + $0x4] sm:$0x1] %vm292, %v698
        %v701 = vld [vmem:[#allocation4 + $0x5] sm:$0x1]
        %v702 = vpack.c.bf16 %v695, %v695
        %704 = vrot.lane.b32.xlu0 %v702, 32
        %v705 = vpop.permute.xlu0 %704
        %v707 = vsel %vm351, %v705, 0
        %709 = vmatpush.bf16.msra.mxu0 0
        %710 = vmatpush.bf16.msra.mxu0 0
        %711 = vmatpush.bf16.msra.mxu0 0
        %712 = vmatpush.bf16.msra.mxu0 0
        %713 = vmatpush.bf16.msra.mxu0 0
        %714 = vmatpush.bf16.msra.mxu0 0
        %715 = vmatpush.bf16.msra.mxu0 %v383
        %716 = vmatpush.bf16.msra.mxu0 %v382
        %717 = vmatmul.bf16.gmra.mxu0 %v707
        %v718 = vpop.f32.mrf.mxu0
        %v719 = vadd.f32 0.0, %v718
        %v720 = vpop.f32.mrf.mxu0
        %721 = vdwg.mxu0
        %v722 = vadd.f32 %v701, %v719
        %v723 = vxor.u32 %v722, 2147483648
        %v724 = vmul.f32 %v723, 1.442695
        %v725 = vpow.pop %v724
        %v726 = vadd.f32 %v725, 1.0
        %v727 = vrcp.pop %v726
        %v728 = vmul.f32 %v726, %v727
        %v729 = vsub.f32 1.0, %v728
        %v730 = vmul.f32 %v727, %v729
        %v731 = vadd.f32 %v727, %v730
        %vm732 = vweird.f32 %v726
        %vm733 = vweird.f32 %v727
        %vm734 = vmor %vm732, %vm733
        %v735 = vsel %vm734, %v727, %v731
        %v736 = vand.u32 2147483647, %v726
        %vm737 = vcmp.eq.f32.partialorder %v736, 8.507059e+37
        %v738 = vand.u32 %v726, 2147483648
        %v739 = vor.u32 1.1754944e-38, %v738
        %v740 = vsel %vm737, %v739, %v735
        %v741 = vmul.f32 1.0, %v740
        %v742 = vtanh.pop %v722
        %v743 = vmul.f32 %v741, %v689
        %745 = vrot.lane.b32.xlu0 %v742, 64
        %v746 = vpop.permute.xlu0 %745
        %v748 = vmul.f32 %v741, %v746
        %750 = vrot.lane.b32.xlu0 %v748, 32
        %v751 = vpop.permute.xlu0 %750
        %v753 = vadd.f32 %v743, %v751
        %v754 = vtanh.pop %v753
        %756 = vrot.lane.b32.xlu0 %v754, 64
        %v757 = vpop.permute.xlu0 %756
        %v759 = vmul.f32 %v741, %v757
        %761 = vrot.lane.b32.xlu0 %v759, 32
        %v762 = vpop.permute.xlu0 %761
        %764 = vst.msk [vmem:[#allocation3 + $0x5] sm:$0x1] %vm292, %v762
        %v765 = vld [vmem:[#allocation4 + $0x6] sm:$0x1]
        %v766 = vpack.c.bf16 %v759, %v759
        %768 = vrot.lane.b32.xlu0 %v766, 32
        %v769 = vpop.permute.xlu0 %768
        %v771 = vsel %vm351, %v769, 0
        %773 = vmatpush.bf16.msra.mxu0 0
        %774 = vmatpush.bf16.msra.mxu0 0
        %775 = vmatpush.bf16.msra.mxu0 0
        %776 = vmatpush.bf16.msra.mxu0 0
        %777 = vmatpush.bf16.msra.mxu0 0
        %778 = vmatpush.bf16.msra.mxu0 0
        %779 = vmatpush.bf16.msra.mxu0 %v383
        %780 = vmatpush.bf16.msra.mxu0 %v382
        %781 = vmatmul.bf16.gmra.mxu0 %v771
        %v782 = vpop.f32.mrf.mxu0
        %v783 = vadd.f32 0.0, %v782
        %v784 = vpop.f32.mrf.mxu0
        %785 = vdwg.mxu0
        %v786 = vadd.f32 %v765, %v783
        %v787 = vxor.u32 %v786, 2147483648
        %v788 = vmul.f32 %v787, 1.442695
        %v789 = vpow.pop %v788
        %v790 = vadd.f32 %v789, 1.0
        %v791 = vrcp.pop %v790
        %v792 = vmul.f32 %v790, %v791
        %v793 = vsub.f32 1.0, %v792
        %v794 = vmul.f32 %v791, %v793
        %v795 = vadd.f32 %v791, %v794
        %vm796 = vweird.f32 %v790
        %vm797 = vweird.f32 %v791
        %vm798 = vmor %vm796, %vm797
        %v799 = vsel %vm798, %v791, %v795
        %v800 = vand.u32 2147483647, %v790
        %vm801 = vcmp.eq.f32.partialorder %v800, 8.507059e+37
        %v802 = vand.u32 %v790, 2147483648
        %v803 = vor.u32 1.1754944e-38, %v802
        %v804 = vsel %vm801, %v803, %v799
        %v805 = vmul.f32 1.0, %v804
        %v806 = vtanh.pop %v786
        %v807 = vmul.f32 %v805, %v753
        %809 = vrot.lane.b32.xlu0 %v806, 64
        %v810 = vpop.permute.xlu0 %809
        %v812 = vmul.f32 %v805, %v810
        %814 = vrot.lane.b32.xlu0 %v812, 32
        %v815 = vpop.permute.xlu0 %814
        %v817 = vadd.f32 %v807, %v815
        %v818 = vtanh.pop %v817
        %820 = vrot.lane.b32.xlu0 %v818, 64
        %v821 = vpop.permute.xlu0 %820
        %v823 = vmul.f32 %v805, %v821
        %825 = vrot.lane.b32.xlu0 %v823, 32
        %v826 = vpop.permute.xlu0 %825
        %828 = vst.msk [vmem:[#allocation3 + $0x6] sm:$0x1] %vm292, %v826
        %v829 = vld [vmem:[#allocation4 + $0x7] sm:$0x1]
        %v830 = vpack.c.bf16 %v823, %v823
        %832 = vrot.lane.b32.xlu0 %v830, 32
        %v833 = vpop.permute.xlu0 %832
        %v835 = vsel %vm351, %v833, 0
        %837 = vmatpush.bf16.msra.mxu0 0
        %838 = vmatpush.bf16.msra.mxu0 0
        %839 = vmatpush.bf16.msra.mxu0 0
        %840 = vmatpush.bf16.msra.mxu0 0
        %841 = vmatpush.bf16.msra.mxu0 0
        %842 = vmatpush.bf16.msra.mxu0 0
        %843 = vmatpush.bf16.msra.mxu0 %v383
        %844 = vmatpush.bf16.msra.mxu0 %v382
        %845 = vmatmul.bf16.gmra.mxu0 %v835
        %v846 = vpop.f32.mrf.mxu0
        %v847 = vadd.f32 0.0, %v846
        %v848 = vpop.f32.mrf.mxu0
        %849 = vdwg.mxu0
        %v850 = vadd.f32 %v829, %v847
        %v851 = vxor.u32 %v850, 2147483648
        %v852 = vmul.f32 %v851, 1.442695
        %v853 = vpow.pop %v852
        %v854 = vadd.f32 %v853, 1.0
        %v855 = vrcp.pop %v854
        %v856 = vmul.f32 %v854, %v855
        %v857 = vsub.f32 1.0, %v856
        %v858 = vmul.f32 %v855, %v857
        %v859 = vadd.f32 %v855, %v858
        %vm860 = vweird.f32 %v854
        %vm861 = vweird.f32 %v855
        %vm862 = vmor %vm860, %vm861
        %v863 = vsel %vm862, %v855, %v859
        %v864 = vand.u32 2147483647, %v854
        %vm865 = vcmp.eq.f32.partialorder %v864, 8.507059e+37
        %v866 = vand.u32 %v854, 2147483648
        %v867 = vor.u32 1.1754944e-38, %v866
        %v868 = vsel %vm865, %v867, %v863
        %v869 = vmul.f32 1.0, %v868
        %v870 = vtanh.pop %v850
        %v871 = vmul.f32 %v869, %v817
        %873 = vrot.lane.b32.xlu0 %v870, 64
        %v874 = vpop.permute.xlu0 %873
        %v876 = vmul.f32 %v869, %v874
        %878 = vrot.lane.b32.xlu0 %v876, 32
        %v879 = vpop.permute.xlu0 %878
        %v881 = vadd.f32 %v871, %v879
        %v882 = vtanh.pop %v881
        %884 = vrot.lane.b32.xlu0 %v882, 64
        %v885 = vpop.permute.xlu0 %884
        %v887 = vmul.f32 %v869, %v885
        %889 = vrot.lane.b32.xlu0 %v887, 32
        %v890 = vpop.permute.xlu0 %889
        %892 = vst.msk [vmem:[#allocation3 + $0x7] sm:$0x1] %vm292, %v890
        %v893 = vld [vmem:[#allocation3] sm:$0xff]
        %v894 = vpack.c.bf16 %v893, %v893
        %v895 = vld [vmem:[%s5] sm:$0xf]
        %v896 = vld [vmem:[%s5 + $0x4] sm:$0xf]
        %v897 = vld [vmem:[%s5 + $0x8] sm:$0xf]
        %v898 = vld [vmem:[%s5 + $0xc] sm:$0xf]
        %v899 = vld [vmem:[#allocation12] sm:$0x1]
        %v901 = vperm.slane %v899, 0
        %v907 = vunpack.c.l.b16 %v895
        %v908 = vunpack.c.l.b16 %v896
        %v909 = vunpack.c.l.b16 %v897
        %v910 = vunpack.c.l.b16 %v898
        %v911 = vpack.c.b16 %v908, %v907
        %v912 = vpack.c.b16 %v910, %v909
        %v916 = vsel %vm351, %v894, 0
        %918 = vmatpush.bf16.msra.mxu0 0
        %919 = vmatpush.bf16.msra.mxu0 0
        %920 = vmatpush.bf16.msra.mxu0 0
        %921 = vmatpush.bf16.msra.mxu0 0
        %922 = vmatpush.bf16.msra.mxu0 0
        %923 = vmatpush.bf16.msra.mxu0 0
        %924 = vmatpush.bf16.msra.mxu0 %v912
        %925 = vmatpush.bf16.msra.mxu0 %v911
        %926 = vmatmul.bf16.gmra.mxu0 %v916
        %v927 = vpop.f32.mrf.mxu0
        %v928 = vadd.f32 %v901, %v927
        %v929 = vpop.f32.mrf.mxu0
        %930 = vdwg.mxu0
        %vm931 = vcmask 64512
        %v932 = vsel %vm931, %v928, -inf
        %933 = vmax.xlane.f32.xlu0 %v932
        %v934 = vpop.xlane.xlu0 %933
        %v935 = vsub.f32 %v928, %v934
        %v936 = vmul.f32 %v935, 1.442695
        %v937 = vpow.pop %v936
        %v938 = vsel %vm931, %v937, 0.0
        %939 = vadd.xlane.f32.xlu0 %v938
        %v940 = vpop.xlane.xlu0 %939
        %v941 = vlog2.pop %v940
        %v942 = vmul.f32 %v941, 0.6931472
        %v943 = vsub.f32 %v935, %v942
        %944 = vst.msk [vmem:[%s286] sm:$0xff] %vm931, %v943
        %s945 = sand.u32 %s165, 1
        %s946 = scalar_lea.sflag [#allocation9], %s945
        %s947 = sand.u32 %s165, 1
        %s948 = smul.addr %s947, 8
        %s949 = scalar_lea.vmem [#allocation13], %s948
        // Predicated region
        $region57: #{lstm_forward.1} parent=43 // pred_check
          %p950 = pneg %p175
        $region58: #{lstm_forward.1} parent=43 // pred_check_branch
          %952 = sbr.rel (%p950) target = $region60
        $region59: #{lstm_forward.1} parent=43 // pred_region
          %954 = vsyncadd %s946, 0
          %s955 = smul.addr %s31, 8
          %s956 = scalar_lea.hbm %s7, %s955
          %s958 = sshll.u32 %s949, 4
          %s959 = int_to_ptr.vmem [resolvable:$true] %s958
          %s960 = sshll.u32 %s956, 4
          %s961 = int_to_ptr.hbm [resolvable:$true] %s960
          %963 = dma.vmem_to_hbm [thread:$0]  %s959, 128, %s961, %s946
        $region60: #{lstm_forward.1} parent=43 // pred_fallthru
          _
      $region44: #{lstm_forward.1} parent=5 // pred_fallthru
        _
      %p964 = scmp.le.s32.totalorder 2, %s26
      // Predicated region
      $region61: #{lstm_forward.1} parent=5 // pred_check
        %p965 = pneg %p964
      $region62: #{lstm_forward.1} parent=5 // pred_check_branch
        %967 = sbr.rel (%p965) target = $region64
      $region63: #{lstm_forward.1} parent=5 // pred_region
        %s968 = ssub.s32 %s26, 2
        // Predicated region
        $region65: #{lstm_forward.1} parent=63 // pred_check
          %p969 = pneg %p181
        $region66: #{lstm_forward.1} parent=63 // pred_check_branch
          %971 = sbr.rel (%p969) target = $region68
        $region67: #{lstm_forward.1} parent=63 // pred_region
          %s972 = sand.u32 %s166, 1
          %s973 = scalar_lea.sflag [#allocation9], %s972
          %s974 = sand.u32 %s166, 1
          %s975 = smul.addr %s974, 8
          %s976 = scalar_lea.vmem [#allocation13], %s975
          %978 = dma.done %s973, 128
        $region68: #{lstm_forward.1} parent=63 // pred_fallthru
          _
      $region64: #{lstm_forward.1} parent=5 // pred_fallthru
        _
    $region6: #{lstm_forward.1} parent=1 // loop_footer
      %s30 = sadd.s32 1, %s26
    $region7: #{lstm_forward.1} parent=1 // loop_footer_branch
      %25 = sbr.rel target = $region3
    $region8: #{lstm_forward.1} parent=1 // loop_exit
      _
    %979 = vsyncpa [#allocation8], 1
    %s980 = scalar_lea.sflag [#allocation8], 1
    %981 = vsyncpa %s980, 1
    %982 = vsyncpa [#allocation11], 1
    %983 = vsyncpa [#allocation9], 1
    %s984 = scalar_lea.sflag [#allocation9], 1
    %985 = vsyncpa %s984, 1

</llo_original>
